<compile_context>
chip_gen: v5e
topology: v5e:2x2
jax: 0.10.0
libtpu: 0.0.40
codegen_flags: <defaults>
</compile_context>

<pallas_src>
import math
import functools

import jax
import jax.numpy as jnp
from jax.experimental import pallas as pl
from jax.experimental.pallas import tpu as pltpu

LN_EPS = 1e-5


# ----------------------------------------------------------------------------
# In-kernel helpers (values already resident in VMEM; statistics in f32)
# ----------------------------------------------------------------------------
def _layernorm(x, g, b):
    mean = jnp.mean(x, axis=-1, keepdims=True)
    var = jnp.mean((x - mean) ** 2, axis=-1, keepdims=True)
    return (x - mean) * jax.lax.rsqrt(var + LN_EPS) * g + b


def _vmem_limit(working_set_bytes):
    # double-buffered blocks + slack; clamp so the limit is valid on v5e/v6e/v7x.
    return int(max(32 << 20, min(64 << 20, 2 * working_set_bytes + (4 << 20))))


def _row_tile(m, max_rows=512):
    """Largest multiple-of-8 row tile <= max_rows dividing m, preferring >=2 grid steps."""
    candidates = [t for t in range(8, min(m, max_rows) + 1, 8) if m % t == 0]
    if not candidates:
        return m
    multi = [t for t in candidates if m // t >= 2]
    return max(multi) if multi else max(candidates)


def _seq_tile(length, max_rows=256):
    """Lq tile: largest multiple-of-8 divisor of length up to max_rows (else full length)."""
    candidates = [t for t in range(8, min(length, max_rows) + 1, 8) if length % t == 0]
    return max(candidates) if candidates else length


# ----------------------------------------------------------------------------
# Fused attention kernel: LN + QKV proj + attention + O-proj + residual
# One (batch, Lq-tile) per grid step; heads are static lane slices (no HBM transpose).
# ----------------------------------------------------------------------------
def fused_attn_kernel(xq_ref, kv_ref, g_ref, b_ref, wq_ref, bq_ref,
                      wkv_ref, bkv_ref, wo_ref, bo_ref, *rest,
                      nhead, ln_kv, mask_mode):
    if mask_mode == "external":
        mask_ref, o_ref = rest
    else:
        (o_ref,) = rest
        mask_ref = None

    tq, d = xq_ref.shape[1], xq_ref.shape[2]
    lk = kv_ref.shape[1]
    hd = d // nhead
    scale = 1.0 / math.sqrt(hd)                  # tensor_dim == head_dim in the reference

    g = g_ref[...]
    beta = b_ref[...]

    # ---- Q path: LayerNorm (f32) + projection (bf16 MXU, f32 accumulate); scale folded in.
    xq = xq_ref[0].astype(jnp.float32)           # (tq, D) pre-LN rows (also the residual)
    yq = _layernorm(xq, g, beta).astype(jnp.bfloat16)
    q = jnp.dot(yq, wq_ref[...], preferred_element_type=jnp.float32) + bq_ref[...]
    q = (q * scale).astype(jnp.bfloat16)         # (tq, D)

    # ---- K/V path: (optionally LayerNorm'd) source, one fused (D, 2D) projection.
    src = kv_ref[0].astype(jnp.float32)          # (Lk, D)
    if ln_kv:
        src = _layernorm(src, g, beta)
    kv = jnp.dot(src.astype(jnp.bfloat16), wkv_ref[...],
                 preferred_element_type=jnp.float32) + bkv_ref[...]
    k = kv[:, :d].astype(jnp.bfloat16)
    v = kv[:, d:].astype(jnp.bfloat16)

    # ---- additive attention mask (external, in-kernel causal, or none)
    if mask_mode == "external":
        mask = mask_ref[...].astype(jnp.float32)
    elif mask_mode == "causal":
        q0 = pl.program_id(1) * tq
        rows = q0 + jax.lax.broadcasted_iota(jnp.int32, (tq, lk), 0)
        cols = jax.lax.broadcasted_iota(jnp.int32, (tq, lk), 1)
        mask = jnp.where(cols > rows, -1e9, 0.0).astype(jnp.float32)
    else:
        mask = None

    # ---- per-head attention with O-projection accumulation (no concatenate)
    wo = wo_ref[...]                             # (D, D) bf16, loaded once
    out = jnp.zeros((tq, d), jnp.float32)
    for h in range(nhead):                       # static python loop (nhead small/static)
        sl = slice(h * hd, (h + 1) * hd)
        s = jax.lax.dot_general(q[:, sl], k[:, sl], (((1,), (1,)), ((), ())),
                                preferred_element_type=jnp.float32)    # (tq, lk)
        if mask is not None:
            s = s + mask
        s = s - jnp.max(s, axis=-1, keepdims=True)                     # stable softmax, f32
        p = jnp.exp(s)
        p = p * pl.reciprocal(jnp.sum(p, axis=-1, keepdims=True), approx=True)
        ph = jnp.dot(p.astype(jnp.bfloat16), v[:, sl],
                     preferred_element_type=jnp.float32)                # (tq, hd)
        out = out + jnp.dot(ph.astype(jnp.bfloat16), wo[sl, :],
                            preferred_element_type=jnp.float32)         # (tq, D)

    out = out + bo_ref[...]
    o_ref[0] = (xq + out).astype(o_ref.dtype)    # fused residual (pre-LN x already in VMEM)


def fused_attention(x, kv_src, g, b, wq, bq, wkv, bkv, wo, bo, *,
                    nhead, ln_kv, mask_mode, att_mask=None, max_q_rows=256):
    B, L, D = x.shape
    Lk = kv_src.shape[1]
    tq = _seq_tile(L, max_q_rows)

    kern = functools.partial(fused_attn_kernel, nhead=nhead, ln_kv=ln_kv,
                             mask_mode=mask_mode)

    in_specs = [
        pl.BlockSpec((1, tq, D), lambda bi, qi: (bi, qi, 0)),   # x: q rows / residual
        pl.BlockSpec((1, Lk, D), lambda bi, qi: (bi, 0, 0)),    # kv source (full sequence)
        pl.BlockSpec((1, D), lambda bi, qi: (0, 0)),            # LN gamma
        pl.BlockSpec((1, D), lambda bi, qi: (0, 0)),            # LN beta
        pl.BlockSpec((D, D), lambda bi, qi: (0, 0)),            # wq   (bf16)
        pl.BlockSpec((1, D), lambda bi, qi: (0, 0)),            # bq
        pl.BlockSpec((D, 2 * D), lambda bi, qi: (0, 0)),        # wkv  (bf16, fused K|V)
        pl.BlockSpec((1, 2 * D), lambda bi, qi: (0, 0)),        # bkv
        pl.BlockSpec((D, D), lambda bi, qi: (0, 0)),            # wo   (bf16)
        pl.BlockSpec((1, D), lambda bi, qi: (0, 0)),            # bo
    ]
    args = [x, kv_src, g, b, wq, bq, wkv, bkv, wo, bo]
    if mask_mode == "external":
        in_specs.append(pl.BlockSpec((tq, Lk), lambda bi, qi: (qi, 0)))
        args.append(att_mask)

    # rough per-step working set: f32 activation blocks + main intermediates + bf16 weights
    est = 4 * (2 * tq * D + Lk * D + Lk * 2 * D + tq * Lk + tq * 3 * D) \
        + 2 * (4 * D * D) + 4 * (8 * D)
    if mask_mode == "external":
        est += 4 * tq * Lk

    return pl.pallas_call(
        kern,
        out_shape=jax.ShapeDtypeStruct((B, L, D), x.dtype),
        grid=(B, pl.cdiv(L, tq)),
        in_specs=in_specs,
        out_specs=pl.BlockSpec((1, tq, D), lambda bi, qi: (bi, qi, 0)),
        compiler_params=pltpu.CompilerParams(
            dimension_semantics=("parallel", "parallel"),
            vmem_limit_bytes=_vmem_limit(est)),
    )(*args)


# ----------------------------------------------------------------------------
# Fused feed-forward kernel: LN3 + FF1 + ReLU + FF2 + residual (row-tiled)
# ----------------------------------------------------------------------------
def ln_ffn_residual_kernel(x_ref, g_ref, b_ref, w1_ref, b1_ref, w2_ref, b2_ref, o_ref):
    x = x_ref[...].astype(jnp.float32)
    y = _layernorm(x, g_ref[...], b_ref[...]).astype(jnp.bfloat16)
    h = jnp.dot(y, w1_ref[...], preferred_element_type=jnp.float32) + b1_ref[...]
    h = jnp.maximum(h, 0.0).astype(jnp.bfloat16)               # ReLU (f32) -> bf16 at MXU
    out = jnp.dot(h, w2_ref[...], preferred_element_type=jnp.float32) + b2_ref[...]
    o_ref[...] = (x + out).astype(o_ref.dtype)                 # residual uses pre-LN x


def ln_ffn_residual(x2d, g, b, w1, b1, w2, b2, *, max_rows=512):
    m, d = x2d.shape
    f = w1.shape[1]
    tm = _row_tile(m, max_rows)
    est = 4 * (2 * tm * d + tm * f) + 2 * (2 * d * f) + 4 * (2 * d + f)
    return pl.pallas_call(
        ln_ffn_residual_kernel,
        out_shape=jax.ShapeDtypeStruct((m, d), x2d.dtype),
        grid=(pl.cdiv(m, tm),),
        in_specs=[pl.BlockSpec((tm, d), lambda i: (i, 0)),
                  pl.BlockSpec((1, d), lambda i: (0, 0)),
                  pl.BlockSpec((1, d), lambda i: (0, 0)),
                  pl.BlockSpec((d, f), lambda i: (0, 0)),
                  pl.BlockSpec((1, f), lambda i: (0, 0)),
                  pl.BlockSpec((f, d), lambda i: (0, 0)),
                  pl.BlockSpec((1, d), lambda i: (0, 0))],
        out_specs=pl.BlockSpec((tm, d), lambda i: (i, 0)),
        compiler_params=pltpu.CompilerParams(
            dimension_semantics=("parallel",),
            vmem_limit_bytes=_vmem_limit(est)),
    )(x2d, g, b, w1, b1, w2, b2)


# ----------------------------------------------------------------------------
# Decoder block
# ----------------------------------------------------------------------------
def decoder_block(x, encoder_out, att_mask, params, nhead):
    """att_mask: None | "causal" (generated in-kernel) | (L, L) additive mask array."""
    B, L, D = x.shape

    if isinstance(att_mask, str) and att_mask == "causal":
        mask_mode, mask_arr = "causal", None
    elif att_mask is None:
        mask_mode, mask_arr = "none", None
    else:
        mask_mode, mask_arr = "external", att_mask

    # ---- self-attention: LN1 + QKV proj + attention + O-proj + residual (one kernel)
    sa = params["self_attn"]
    x = fused_attention(x, x, params["ln1_g"], params["ln1_b"],
                        sa["wq"], sa["bq"], sa["wkv"], sa["bkv"], sa["wo"], sa["bo"],
                        nhead=nhead, ln_kv=True, mask_mode=mask_mode, att_mask=mask_arr)

    # ---- cross-attention: LN2 on x (Q) + raw encoder_out K/V; no mask (reference passes None)
    ca = params["cross_attn"]
    x = fused_attention(x, encoder_out, params["ln2_g"], params["ln2_b"],
                        ca["wq"], ca["bq"], ca["wkv"], ca["bkv"], ca["wo"], ca["bo"],
                        nhead=nhead, ln_kv=False, mask_mode="none", att_mask=None)

    # ---- feed-forward: LN3 + FF1 + ReLU + FF2 + residual (dropouts identity in eval)
    x = ln_ffn_residual(x.reshape(B * L, D), params["ln3_g"], params["ln3_b"],
                        params["ff1_w"], params["ff1_b"],
                        params["ff2_w"], params["ff2_b"]).reshape(B, L, D)
    return x


# ----------------------------------------------------------------------------
# Parameter init (nn.Linear / nn.LayerNorm shapes); weight matrices stored bf16
# ----------------------------------------------------------------------------
def _init_linear(key, fan_in, fan_out):
    bound = 1.0 / math.sqrt(fan_in)
    kw, kb = jax.random.split(key)
    w = jax.random.uniform(kw, (fan_in, fan_out), jnp.float32, -bound, bound)
    b = jax.random.uniform(kb, (1, fan_out), jnp.float32, -bound, bound)
    return w, b


def _init_mha(key, ndim):
    ks = jax.random.split(key, 4)
    wq, bq = _init_linear(ks[0], ndim, ndim)
    wk, bk = _init_linear(ks[1], ndim, ndim)
    wv, bv = _init_linear(ks[2], ndim, ndim)
    wo, bo = _init_linear(ks[3], ndim, ndim)
    return dict(
        wq=wq.astype(jnp.bfloat16), bq=bq,
        wkv=jnp.concatenate([wk, wv], axis=1).astype(jnp.bfloat16),   # (D, 2D) fused K|V
        bkv=jnp.concatenate([bk, bv], axis=1),
        wo=wo.astype(jnp.bfloat16), bo=bo,
    )


def init_params(key, ndim, ndim_ff):
    ks = jax.random.split(key, 4)
    ff1_w, ff1_b = _init_linear(ks[0], ndim, ndim_ff)
    ff2_w, ff2_b = _init_linear(ks[1], ndim_ff, ndim)
    ones = jnp.ones((1, ndim), jnp.float32)
    zeros = jnp.zeros((1, ndim), jnp.float32)
    return dict(
        self_attn=_init_mha(ks[2], ndim),
        cross_attn=_init_mha(ks[3], ndim),
        ln1_g=ones, ln1_b=zeros,
        ln2_g=ones, ln2_b=zeros,
        ln3_g=ones, ln3_b=zeros,
        ff1_w=ff1_w.astype(jnp.bfloat16), ff1_b=ff1_b,
        ff2_w=ff2_w.astype(jnp.bfloat16), ff2_b=ff2_b,
    )


# ----------------------------------------------------------------------------
# Pure-JAX reference (f32 math, same bf16-stored weights) for a sanity check
# ----------------------------------------------------------------------------
def _mha_ref(q_src, kv_src, p, nhead, mask):
    D = q_src.shape[-1]
    hd = D // nhead
    q = q_src @ p["wq"].astype(jnp.float32) + p["bq"]
    kv = kv_src @ p["wkv"].astype(jnp.float32) + p["bkv"]
    k, v = kv[..., :D], kv[..., D:]
    B, Lq = q.shape[0], q.shape[1]
    Lk = k.shape[1]
    qh = q.reshape(B, Lq, nhead, hd).transpose(0, 2, 1, 3)
    kh = k.reshape(B, Lk, nhead, hd).transpose(0, 2, 1, 3)
    vh = v.reshape(B, Lk, nhead, hd).transpose(0, 2, 1, 3)
    s = jnp.einsum("bhqd,bhkd->bhqk", qh, kh) / math.sqrt(hd)
    if mask is not None:
        s = s + mask
    att = jax.nn.softmax(s, axis=-1)
    o = jnp.einsum("bhqk,bhkd->bhqd", att, vh)
    o = o.transpose(0, 2, 1, 3).reshape(B, Lq, D)
    return o @ p["wo"].astype(jnp.float32) + p["bo"]


def decoder_block_ref(x, encoder_out, att_mask, params, nhead):
    y = _layernorm(x, params["ln1_g"], params["ln1_b"])
    x = x + _mha_ref(y, y, params["self_attn"], nhead, att_mask)
    y = _layernorm(x, params["ln2_g"], params["ln2_b"])
    x = x + _mha_ref(y, encoder_out, params["cross_attn"], nhead, None)
    y = _layernorm(x, params["ln3_g"], params["ln3_b"])
    h = jax.nn.relu(y @ params["ff1_w"].astype(jnp.float32) + params["ff1_b"])
    return x + h @ params["ff2_w"].astype(jnp.float32) + params["ff2_b"]


# ----------------------------------------------------------------------------
# Demo
# ----------------------------------------------------------------------------
if __name__ == "__main__":
    B, L, Lenc = 2, 8, 8
    nhead, ndim, ndim_ff = 4, 32, 64

    key = jax.random.PRNGKey(0)
    kx, kenc, kp = jax.random.split(key, 3)

    x = jax.random.normal(kx, (B, L, ndim), jnp.float32)
    encoder_out = jax.random.normal(kenc, (B, Lenc, ndim), jnp.float32)

    # causal additive attention mask (0 on/below diagonal, -1e9 above)
    causal_mask = jnp.where(
        jnp.tril(jnp.ones((L, L), jnp.bool_)), 0.0, -1e9
    ).astype(jnp.float32)

    params = init_params(kp, ndim, ndim_ff)

    # in-kernel generated causal mask (no HBM mask traffic)
    out = decoder_block(x, encoder_out, "causal", params, nhead)
    # explicit external additive mask path (general att_mask semantics of the module)
    out_ext = decoder_block(x, encoder_out, causal_mask, params, nhead)
    out, out_ext = jax.block_until_ready((out, out_ext))

    assert out.shape == (B, L, ndim) and out.dtype == jnp.float32
    assert bool(jnp.all(jnp.isfinite(out)))

    ref = decoder_block_ref(x, encoder_out, causal_mask, params, nhead)
    err_ref = float(jnp.max(jnp.abs(out - ref)))
    err_paths = float(jnp.max(jnp.abs(out - out_ext)))
    assert err_ref < 1e-1, f"mismatch vs f32 reference: {err_ref}"
    assert err_paths < 1e-5, f"causal vs external mask mismatch: {err_paths}"

    print("KERNEL_OK")
</pallas_src>

<mosaic_0001>
module attributes {stable_mosaic.version = 11 : i64} {
  func.func @fused_attn_kernel(%arg0: i32, %arg1: i32, %arg2: memref<1x8x32xf32, #tpu.memory_space<vmem>>, %arg3: memref<1x8x32xf32, #tpu.memory_space<vmem>>, %arg4: memref<1x32xf32, #tpu.memory_space<vmem>>, %arg5: memref<1x32xf32, #tpu.memory_space<vmem>>, %arg6: memref<32x32xbf16, #tpu.memory_space<vmem>>, %arg7: memref<1x32xf32, #tpu.memory_space<vmem>>, %arg8: memref<32x64xbf16, #tpu.memory_space<vmem>>, %arg9: memref<1x64xf32, #tpu.memory_space<vmem>>, %arg10: memref<32x32xbf16, #tpu.memory_space<vmem>>, %arg11: memref<1x32xf32, #tpu.memory_space<vmem>>, %arg12: memref<1x8x32xf32, #tpu.memory_space<vmem>>) attributes {dimension_semantics = [#tpu.dimension_semantics<parallel>, #tpu.dimension_semantics<parallel>], iteration_bounds = array<i64: 2, 1>, scalar_prefetch = 0 : i64, scratch_operands = 0 : i64, tpu.core_type = #tpu.core_type<tc>, window_params = [{transform_indices = @transform_0, window_bounds = array<i64: 1, 8, 32>}, {transform_indices = @transform_1, window_bounds = array<i64: 1, 8, 32>}, {pipeline_mode = #tpu.pipeline_mode<synchronous>, transform_indices = @transform_2, window_bounds = array<i64: 1, 32>}, {pipeline_mode = #tpu.pipeline_mode<synchronous>, transform_indices = @transform_3, window_bounds = array<i64: 1, 32>}, {pipeline_mode = #tpu.pipeline_mode<synchronous>, transform_indices = @transform_4, window_bounds = array<i64: 32, 32>}, {pipeline_mode = #tpu.pipeline_mode<synchronous>, transform_indices = @transform_5, window_bounds = array<i64: 1, 32>}, {pipeline_mode = #tpu.pipeline_mode<synchronous>, transform_indices = @transform_6, window_bounds = array<i64: 32, 64>}, {pipeline_mode = #tpu.pipeline_mode<synchronous>, transform_indices = @transform_7, window_bounds = array<i64: 1, 64>}, {pipeline_mode = #tpu.pipeline_mode<synchronous>, transform_indices = @transform_8, window_bounds = array<i64: 32, 32>}, {pipeline_mode = #tpu.pipeline_mode<synchronous>, transform_indices = @transform_9, window_bounds = array<i64: 1, 32>}, {transform_indices = @transform_10, window_bounds = array<i64: 1, 8, 32>}]} {
    %c0 = arith.constant 0 : index
    %c0_0 = arith.constant 0 : index
    %0 = vector.load %arg4[%c0, %c0_0] : memref<1x32xf32, #tpu.memory_space<vmem>>, vector<1x32xf32>
    %c0_1 = arith.constant 0 : index
    %c0_2 = arith.constant 0 : index
    %1 = vector.load %arg5[%c0_1, %c0_2] : memref<1x32xf32, #tpu.memory_space<vmem>>, vector<1x32xf32>
    %c0_3 = arith.constant 0 : index
    %c0_4 = arith.constant 0 : index
    %c0_5 = arith.constant 0 : index
    %2 = vector.load %arg2[%c0_3, %c0_4, %c0_5] : memref<1x8x32xf32, #tpu.memory_space<vmem>>, vector<1x8x32xf32>
    %3 = vector.shape_cast %2 : vector<1x8x32xf32> to vector<8x32xf32>
    %cst = arith.constant dense<0.000000e+00> : vector<8xf32>
    %4 = vector.multi_reduction <add>, %3, %cst [1] : vector<8x32xf32> to vector<8xf32>
    %5 = vector.shape_cast %4 : vector<8xf32> to vector<8x1xf32>
    %cst_6 = arith.constant 3.200000e+01 : f32
    %6 = vector.broadcast %cst_6 : f32 to vector<8x1xf32>
    %7 = arith.divf %5, %6 : vector<8x1xf32>
    %8 = vector.broadcast %7 : vector<8x1xf32> to vector<8x32xf32>
    %9 = arith.subf %3, %8 : vector<8x32xf32>
    %10 = arith.mulf %9, %9 : vector<8x32xf32>
    %cst_7 = arith.constant dense<0.000000e+00> : vector<8xf32>
    %11 = vector.multi_reduction <add>, %10, %cst_7 [1] : vector<8x32xf32> to vector<8xf32>
    %12 = vector.shape_cast %11 : vector<8xf32> to vector<8x1xf32>
    %cst_8 = arith.constant 3.200000e+01 : f32
    %13 = vector.broadcast %cst_8 : f32 to vector<8x1xf32>
    %14 = arith.divf %12, %13 : vector<8x1xf32>
    %15 = vector.broadcast %7 : vector<8x1xf32> to vector<8x32xf32>
    %16 = arith.subf %3, %15 : vector<8x32xf32>
    %cst_9 = arith.constant 9.99999974E-6 : f32
    %17 = vector.broadcast %cst_9 : f32 to vector<8x1xf32>
    %18 = arith.addf %14, %17 : vector<8x1xf32>
    %19 = math.rsqrt %18 : vector<8x1xf32>
    %20 = vector.broadcast %19 : vector<8x1xf32> to vector<8x32xf32>
    %21 = arith.mulf %16, %20 : vector<8x32xf32>
    %22 = vector.broadcast %0 : vector<1x32xf32> to vector<8x32xf32>
    %23 = arith.mulf %21, %22 : vector<8x32xf32>
    %24 = vector.broadcast %1 : vector<1x32xf32> to vector<8x32xf32>
    %25 = arith.addf %23, %24 : vector<8x32xf32>
    %26 = arith.truncf %25 : vector<8x32xf32> to vector<8x32xbf16>
    %c0_10 = arith.constant 0 : index
    %c0_11 = arith.constant 0 : index
    %27 = vector.load %arg6[%c0_10, %c0_11] : memref<32x32xbf16, #tpu.memory_space<vmem>>, vector<32x32xbf16>
    %cst_12 = arith.constant dense<0.000000e+00> : vector<8x32xf32>
    %28 = tpu.matmul %26, %27, %cst_12 {dimension_numbers = #tpu.dot_dimension_numbers<[1], [0], [0], [1], [0, 0, 1, 1], [], []>} : vector<8x32xbf16>, vector<32x32xbf16>, vector<8x32xf32> -> vector<8x32xf32>
    %c0_13 = arith.constant 0 : index
    %c0_14 = arith.constant 0 : index
    %29 = vector.load %arg7[%c0_13, %c0_14] : memref<1x32xf32, #tpu.memory_space<vmem>>, vector<1x32xf32>
    %30 = vector.broadcast %29 : vector<1x32xf32> to vector<8x32xf32>
    %31 = arith.addf %28, %30 : vector<8x32xf32>
    %cst_15 = arith.constant 0.353553385 : f32
    %32 = vector.broadcast %cst_15 : f32 to vector<8x32xf32>
    %33 = arith.mulf %31, %32 : vector<8x32xf32>
    %34 = arith.truncf %33 : vector<8x32xf32> to vector<8x32xbf16>
    %c0_16 = arith.constant 0 : index
    %c0_17 = arith.constant 0 : index
    %c0_18 = arith.constant 0 : index
    %35 = vector.load %arg3[%c0_16, %c0_17, %c0_18] : memref<1x8x32xf32, #tpu.memory_space<vmem>>, vector<1x8x32xf32>
    %36 = vector.shape_cast %35 : vector<1x8x32xf32> to vector<8x32xf32>
    %cst_19 = arith.constant dense<0.000000e+00> : vector<8xf32>
    %37 = vector.multi_reduction <add>, %36, %cst_19 [1] : vector<8x32xf32> to vector<8xf32>
    %38 = vector.shape_cast %37 : vector<8xf32> to vector<8x1xf32>
    %cst_20 = arith.constant 3.200000e+01 : f32
    %39 = vector.broadcast %cst_20 : f32 to vector<8x1xf32>
    %40 = arith.divf %38, %39 : vector<8x1xf32>
    %41 = vector.broadcast %40 : vector<8x1xf32> to vector<8x32xf32>
    %42 = arith.subf %36, %41 : vector<8x32xf32>
    %43 = arith.mulf %42, %42 : vector<8x32xf32>
    %cst_21 = arith.constant dense<0.000000e+00> : vector<8xf32>
    %44 = vector.multi_reduction <add>, %43, %cst_21 [1] : vector<8x32xf32> to vector<8xf32>
    %45 = vector.shape_cast %44 : vector<8xf32> to vector<8x1xf32>
    %cst_22 = arith.constant 3.200000e+01 : f32
    %46 = vector.broadcast %cst_22 : f32 to vector<8x1xf32>
    %47 = arith.divf %45, %46 : vector<8x1xf32>
    %48 = vector.broadcast %40 : vector<8x1xf32> to vector<8x32xf32>
    %49 = arith.subf %36, %48 : vector<8x32xf32>
    %cst_23 = arith.constant 9.99999974E-6 : f32
    %50 = vector.broadcast %cst_23 : f32 to vector<8x1xf32>
    %51 = arith.addf %47, %50 : vector<8x1xf32>
    %52 = math.rsqrt %51 : vector<8x1xf32>
    %53 = vector.broadcast %52 : vector<8x1xf32> to vector<8x32xf32>
    %54 = arith.mulf %49, %53 : vector<8x32xf32>
    %55 = vector.broadcast %0 : vector<1x32xf32> to vector<8x32xf32>
    %56 = arith.mulf %54, %55 : vector<8x32xf32>
    %57 = vector.broadcast %1 : vector<1x32xf32> to vector<8x32xf32>
    %58 = arith.addf %56, %57 : vector<8x32xf32>
    %59 = arith.truncf %58 : vector<8x32xf32> to vector<8x32xbf16>
    %c0_24 = arith.constant 0 : index
    %c0_25 = arith.constant 0 : index
    %60 = vector.load %arg8[%c0_24, %c0_25] : memref<32x64xbf16, #tpu.memory_space<vmem>>, vector<32x64xbf16>
    %cst_26 = arith.constant dense<0.000000e+00> : vector<8x64xf32>
    %61 = tpu.matmul %59, %60, %cst_26 {dimension_numbers = #tpu.dot_dimension_numbers<[1], [0], [0], [1], [0, 0, 1, 1], [], []>} : vector<8x32xbf16>, vector<32x64xbf16>, vector<8x64xf32> -> vector<8x64xf32>
    %c0_27 = arith.constant 0 : index
    %c0_28 = arith.constant 0 : index
    %62 = vector.load %arg9[%c0_27, %c0_28] : memref<1x64xf32, #tpu.memory_space<vmem>>, vector<1x64xf32>
    %63 = vector.broadcast %62 : vector<1x64xf32> to vector<8x64xf32>
    %64 = arith.addf %61, %63 : vector<8x64xf32>
    %65 = vector.extract_strided_slice %64 {offsets = [0, 0], sizes = [8, 32], strides = [1, 1]} : vector<8x64xf32> to vector<8x32xf32>
    %66 = arith.truncf %65 : vector<8x32xf32> to vector<8x32xbf16>
    %67 = vector.extract_strided_slice %64 {offsets = [0, 32], sizes = [8, 32], strides = [1, 1]} : vector<8x64xf32> to vector<8x32xf32>
    %68 = arith.truncf %67 : vector<8x32xf32> to vector<8x32xbf16>
    %c8_i32 = arith.constant 8 : i32
    %69 = arith.muli %arg1, %c8_i32 : i32
    %70 = tpu.iota {dimensions = array<i32: 0>} : vector<8x8xi32>
    %71 = vector.broadcast %69 : i32 to vector<8x8xi32>
    %72 = arith.addi %71, %70 : vector<8x8xi32>
    %73 = tpu.iota {dimensions = array<i32: 1>} : vector<8x8xi32>
    %74 = arith.cmpi sgt, %73, %72 : vector<8x8xi32>
    %cst_29 = arith.constant -1.000000e+09 : f32
    %cst_30 = arith.constant 0.000000e+00 : f32
    %75 = vector.broadcast %cst_29 : f32 to vector<8x8xf32>
    %76 = vector.broadcast %cst_30 : f32 to vector<8x8xf32>
    %77 = arith.select %74, %75, %76 : vector<8x8xi1>, vector<8x8xf32>
    %c0_31 = arith.constant 0 : index
    %c0_32 = arith.constant 0 : index
    %78 = vector.load %arg10[%c0_31, %c0_32] : memref<32x32xbf16, #tpu.memory_space<vmem>>, vector<32x32xbf16>
    %cst_33 = arith.constant 0.000000e+00 : f32
    %79 = vector.broadcast %cst_33 : f32 to vector<8x32xf32>
    %80 = vector.extract_strided_slice %34 {offsets = [0, 0], sizes = [8, 8], strides = [1, 1]} : vector<8x32xbf16> to vector<8x8xbf16>
    %81 = vector.extract_strided_slice %66 {offsets = [0, 0], sizes = [8, 8], strides = [1, 1]} : vector<8x32xbf16> to vector<8x8xbf16>
    %cst_34 = arith.constant dense<0.000000e+00> : vector<8x8xf32>
    %82 = tpu.matmul %80, %81, %cst_34 {dimension_numbers = #tpu.dot_dimension_numbers<[1], [1], [0], [0], [0, 0, 1, 0], [], []>} : vector<8x8xbf16>, vector<8x8xbf16>, vector<8x8xf32> -> vector<8x8xf32>
    %83 = arith.addf %82, %77 : vector<8x8xf32>
    %cst_35 = arith.constant dense<0xFF800000> : vector<8xf32>
    %84 = vector.multi_reduction <maximumf>, %83, %cst_35 [1] : vector<8x8xf32> to vector<8xf32>
    %85 = vector.shape_cast %84 : vector<8xf32> to vector<8x1xf32>
    %86 = vector.broadcast %85 : vector<8x1xf32> to vector<8x8xf32>
    %87 = arith.subf %83, %86 : vector<8x8xf32>
    %88 = math.exp %87 : vector<8x8xf32>
    %cst_36 = arith.constant dense<0.000000e+00> : vector<8xf32>
    %89 = vector.multi_reduction <add>, %88, %cst_36 [1] : vector<8x8xf32> to vector<8xf32>
    %90 = vector.shape_cast %89 : vector<8xf32> to vector<8x1xf32>
    %91 = tpu.reciprocal %90 {approx = true} : vector<8x1xf32> -> vector<8x1xf32>
    %92 = vector.broadcast %91 : vector<8x1xf32> to vector<8x8xf32>
    %93 = arith.mulf %88, %92 : vector<8x8xf32>
    %94 = arith.truncf %93 : vector<8x8xf32> to vector<8x8xbf16>
    %95 = vector.extract_strided_slice %68 {offsets = [0, 0], sizes = [8, 8], strides = [1, 1]} : vector<8x32xbf16> to vector<8x8xbf16>
    %cst_37 = arith.constant dense<0.000000e+00> : vector<8x8xf32>
    %96 = tpu.matmul %94, %95, %cst_37 {dimension_numbers = #tpu.dot_dimension_numbers<[1], [0], [0], [1], [0, 0, 1, 1], [], []>} : vector<8x8xbf16>, vector<8x8xbf16>, vector<8x8xf32> -> vector<8x8xf32>
    %97 = arith.truncf %96 : vector<8x8xf32> to vector<8x8xbf16>
    %98 = vector.extract_strided_slice %78 {offsets = [0, 0], sizes = [8, 32], strides = [1, 1]} : vector<32x32xbf16> to vector<8x32xbf16>
    %cst_38 = arith.constant dense<0.000000e+00> : vector<8x32xf32>
    %99 = tpu.matmul %97, %98, %cst_38 {dimension_numbers = #tpu.dot_dimension_numbers<[1], [0], [0], [1], [0, 0, 1, 1], [], []>} : vector<8x8xbf16>, vector<8x32xbf16>, vector<8x32xf32> -> vector<8x32xf32>
    %100 = arith.addf %79, %99 : vector<8x32xf32>
    %101 = vector.extract_strided_slice %34 {offsets = [0, 8], sizes = [8, 8], strides = [1, 1]} : vector<8x32xbf16> to vector<8x8xbf16>
    %102 = vector.extract_strided_slice %66 {offsets = [0, 8], sizes = [8, 8], strides = [1, 1]} : vector<8x32xbf16> to vector<8x8xbf16>
    %cst_39 = arith.constant dense<0.000000e+00> : vector<8x8xf32>
    %103 = tpu.matmul %101, %102, %cst_39 {dimension_numbers = #tpu.dot_dimension_numbers<[1], [1], [0], [0], [0, 0, 1, 0], [], []>} : vector<8x8xbf16>, vector<8x8xbf16>, vector<8x8xf32> -> vector<8x8xf32>
    %104 = arith.addf %103, %77 : vector<8x8xf32>
    %cst_40 = arith.constant dense<0xFF800000> : vector<8xf32>
    %105 = vector.multi_reduction <maximumf>, %104, %cst_40 [1] : vector<8x8xf32> to vector<8xf32>
    %106 = vector.shape_cast %105 : vector<8xf32> to vector<8x1xf32>
    %107 = vector.broadcast %106 : vector<8x1xf32> to vector<8x8xf32>
    %108 = arith.subf %104, %107 : vector<8x8xf32>
    %109 = math.exp %108 : vector<8x8xf32>
    %cst_41 = arith.constant dense<0.000000e+00> : vector<8xf32>
    %110 = vector.multi_reduction <add>, %109, %cst_41 [1] : vector<8x8xf32> to vector<8xf32>
    %111 = vector.shape_cast %110 : vector<8xf32> to vector<8x1xf32>
    %112 = tpu.reciprocal %111 {approx = true} : vector<8x1xf32> -> vector<8x1xf32>
    %113 = vector.broadcast %112 : vector<8x1xf32> to vector<8x8xf32>
    %114 = arith.mulf %109, %113 : vector<8x8xf32>
    %115 = arith.truncf %114 : vector<8x8xf32> to vector<8x8xbf16>
    %116 = vector.extract_strided_slice %68 {offsets = [0, 8], sizes = [8, 8], strides = [1, 1]} : vector<8x32xbf16> to vector<8x8xbf16>
    %cst_42 = arith.constant dense<0.000000e+00> : vector<8x8xf32>
    %117 = tpu.matmul %115, %116, %cst_42 {dimension_numbers = #tpu.dot_dimension_numbers<[1], [0], [0], [1], [0, 0, 1, 1], [], []>} : vector<8x8xbf16>, vector<8x8xbf16>, vector<8x8xf32> -> vector<8x8xf32>
    %118 = arith.truncf %117 : vector<8x8xf32> to vector<8x8xbf16>
    %119 = vector.extract_strided_slice %78 {offsets = [8, 0], sizes = [8, 32], strides = [1, 1]} : vector<32x32xbf16> to vector<8x32xbf16>
    %cst_43 = arith.constant dense<0.000000e+00> : vector<8x32xf32>
    %120 = tpu.matmul %118, %119, %cst_43 {dimension_numbers = #tpu.dot_dimension_numbers<[1], [0], [0], [1], [0, 0, 1, 1], [], []>} : vector<8x8xbf16>, vector<8x32xbf16>, vector<8x32xf32> -> vector<8x32xf32>
    %121 = arith.addf %100, %120 : vector<8x32xf32>
    %122 = vector.extract_strided_slice %34 {offsets = [0, 16], sizes = [8, 8], strides = [1, 1]} : vector<8x32xbf16> to vector<8x8xbf16>
    %123 = vector.extract_strided_slice %66 {offsets = [0, 16], sizes = [8, 8], strides = [1, 1]} : vector<8x32xbf16> to vector<8x8xbf16>
    %cst_44 = arith.constant dense<0.000000e+00> : vector<8x8xf32>
    %124 = tpu.matmul %122, %123, %cst_44 {dimension_numbers = #tpu.dot_dimension_numbers<[1], [1], [0], [0], [0, 0, 1, 0], [], []>} : vector<8x8xbf16>, vector<8x8xbf16>, vector<8x8xf32> -> vector<8x8xf32>
    %125 = arith.addf %124, %77 : vector<8x8xf32>
    %cst_45 = arith.constant dense<0xFF800000> : vector<8xf32>
    %126 = vector.multi_reduction <maximumf>, %125, %cst_45 [1] : vector<8x8xf32> to vector<8xf32>
    %127 = vector.shape_cast %126 : vector<8xf32> to vector<8x1xf32>
    %128 = vector.broadcast %127 : vector<8x1xf32> to vector<8x8xf32>
    %129 = arith.subf %125, %128 : vector<8x8xf32>
    %130 = math.exp %129 : vector<8x8xf32>
    %cst_46 = arith.constant dense<0.000000e+00> : vector<8xf32>
    %131 = vector.multi_reduction <add>, %130, %cst_46 [1] : vector<8x8xf32> to vector<8xf32>
    %132 = vector.shape_cast %131 : vector<8xf32> to vector<8x1xf32>
    %133 = tpu.reciprocal %132 {approx = true} : vector<8x1xf32> -> vector<8x1xf32>
    %134 = vector.broadcast %133 : vector<8x1xf32> to vector<8x8xf32>
    %135 = arith.mulf %130, %134 : vector<8x8xf32>
    %136 = arith.truncf %135 : vector<8x8xf32> to vector<8x8xbf16>
    %137 = vector.extract_strided_slice %68 {offsets = [0, 16], sizes = [8, 8], strides = [1, 1]} : vector<8x32xbf16> to vector<8x8xbf16>
    %cst_47 = arith.constant dense<0.000000e+00> : vector<8x8xf32>
    %138 = tpu.matmul %136, %137, %cst_47 {dimension_numbers = #tpu.dot_dimension_numbers<[1], [0], [0], [1], [0, 0, 1, 1], [], []>} : vector<8x8xbf16>, vector<8x8xbf16>, vector<8x8xf32> -> vector<8x8xf32>
    %139 = arith.truncf %138 : vector<8x8xf32> to vector<8x8xbf16>
    %140 = vector.extract_strided_slice %78 {offsets = [16, 0], sizes = [8, 32], strides = [1, 1]} : vector<32x32xbf16> to vector<8x32xbf16>
    %cst_48 = arith.constant dense<0.000000e+00> : vector<8x32xf32>
    %141 = tpu.matmul %139, %140, %cst_48 {dimension_numbers = #tpu.dot_dimension_numbers<[1], [0], [0], [1], [0, 0, 1, 1], [], []>} : vector<8x8xbf16>, vector<8x32xbf16>, vector<8x32xf32> -> vector<8x32xf32>
    %142 = arith.addf %121, %141 : vector<8x32xf32>
    %143 = vector.extract_strided_slice %34 {offsets = [0, 24], sizes = [8, 8], strides = [1, 1]} : vector<8x32xbf16> to vector<8x8xbf16>
    %144 = vector.extract_strided_slice %66 {offsets = [0, 24], sizes = [8, 8], strides = [1, 1]} : vector<8x32xbf16> to vector<8x8xbf16>
    %cst_49 = arith.constant dense<0.000000e+00> : vector<8x8xf32>
    %145 = tpu.matmul %143, %144, %cst_49 {dimension_numbers = #tpu.dot_dimension_numbers<[1], [1], [0], [0], [0, 0, 1, 0], [], []>} : vector<8x8xbf16>, vector<8x8xbf16>, vector<8x8xf32> -> vector<8x8xf32>
    %146 = arith.addf %145, %77 : vector<8x8xf32>
    %cst_50 = arith.constant dense<0xFF800000> : vector<8xf32>
    %147 = vector.multi_reduction <maximumf>, %146, %cst_50 [1] : vector<8x8xf32> to vector<8xf32>
    %148 = vector.shape_cast %147 : vector<8xf32> to vector<8x1xf32>
    %149 = vector.broadcast %148 : vector<8x1xf32> to vector<8x8xf32>
    %150 = arith.subf %146, %149 : vector<8x8xf32>
    %151 = math.exp %150 : vector<8x8xf32>
    %cst_51 = arith.constant dense<0.000000e+00> : vector<8xf32>
    %152 = vector.multi_reduction <add>, %151, %cst_51 [1] : vector<8x8xf32> to vector<8xf32>
    %153 = vector.shape_cast %152 : vector<8xf32> to vector<8x1xf32>
    %154 = tpu.reciprocal %153 {approx = true} : vector<8x1xf32> -> vector<8x1xf32>
    %155 = vector.broadcast %154 : vector<8x1xf32> to vector<8x8xf32>
    %156 = arith.mulf %151, %155 : vector<8x8xf32>
    %157 = arith.truncf %156 : vector<8x8xf32> to vector<8x8xbf16>
    %158 = vector.extract_strided_slice %68 {offsets = [0, 24], sizes = [8, 8], strides = [1, 1]} : vector<8x32xbf16> to vector<8x8xbf16>
    %cst_52 = arith.constant dense<0.000000e+00> : vector<8x8xf32>
    %159 = tpu.matmul %157, %158, %cst_52 {dimension_numbers = #tpu.dot_dimension_numbers<[1], [0], [0], [1], [0, 0, 1, 1], [], []>} : vector<8x8xbf16>, vector<8x8xbf16>, vector<8x8xf32> -> vector<8x8xf32>
    %160 = arith.truncf %159 : vector<8x8xf32> to vector<8x8xbf16>
    %161 = vector.extract_strided_slice %78 {offsets = [24, 0], sizes = [8, 32], strides = [1, 1]} : vector<32x32xbf16> to vector<8x32xbf16>
    %cst_53 = arith.constant dense<0.000000e+00> : vector<8x32xf32>
    %162 = tpu.matmul %160, %161, %cst_53 {dimension_numbers = #tpu.dot_dimension_numbers<[1], [0], [0], [1], [0, 0, 1, 1], [], []>} : vector<8x8xbf16>, vector<8x32xbf16>, vector<8x32xf32> -> vector<8x32xf32>
    %163 = arith.addf %142, %162 : vector<8x32xf32>
    %c0_54 = arith.constant 0 : index
    %c0_55 = arith.constant 0 : index
    %164 = vector.load %arg11[%c0_54, %c0_55] : memref<1x32xf32, #tpu.memory_space<vmem>>, vector<1x32xf32>
    %165 = vector.broadcast %164 : vector<1x32xf32> to vector<8x32xf32>
    %166 = arith.addf %163, %165 : vector<8x32xf32>
    %167 = arith.addf %3, %166 : vector<8x32xf32>
    %c0_56 = arith.constant 0 : index
    %c0_57 = arith.constant 0 : index
    %c0_58 = arith.constant 0 : index
    %168 = vector.load %arg12[%c0_56, %c0_57, %c0_58] : memref<1x8x32xf32, #tpu.memory_space<vmem>>, vector<1x8x32xf32>
    %169 = vector.shape_cast %168 : vector<1x8x32xf32> to vector<8x32xf32>
    %170 = vector.shape_cast %167 : vector<8x32xf32> to vector<1x8x32xf32>
    tpu.vector_store %arg12[%c0_56, %c0_57, %c0_58], %170 {strides = array<i32>} : memref<1x8x32xf32, #tpu.memory_space<vmem>>, vector<1x8x32xf32>,
    return
  }
  func.func @transform_0(%arg0: i32, %arg1: i32) -> (i32, i32, i32) {
    %c0_i32 = arith.constant 0 : i32
    %c0_i32_0 = arith.constant 0 : i32
    return %arg0, %arg1, %c0_i32 : i32, i32, i32
  }
  func.func @transform_1(%arg0: i32, %arg1: i32) -> (i32, i32, i32) {
    %c0_i32 = arith.constant 0 : i32
    %c0_i32_0 = arith.constant 0 : i32
    %c0_i32_1 = arith.constant 0 : i32
    return %arg0, %c0_i32, %c0_i32_0 : i32, i32, i32
  }
  func.func @transform_2(%arg0: i32, %arg1: i32) -> (i32, i32) {
    %c0_i32 = arith.constant 0 : i32
    %c0_i32_0 = arith.constant 0 : i32
    %c0_i32_1 = arith.constant 0 : i32
    return %c0_i32, %c0_i32_0 : i32, i32
  }
  func.func @transform_3(%arg0: i32, %arg1: i32) -> (i32, i32) {
    %c0_i32 = arith.constant 0 : i32
    %c0_i32_0 = arith.constant 0 : i32
    %c0_i32_1 = arith.constant 0 : i32
    return %c0_i32, %c0_i32_0 : i32, i32
  }
  func.func @transform_4(%arg0: i32, %arg1: i32) -> (i32, i32) {
    %c0_i32 = arith.constant 0 : i32
    %c0_i32_0 = arith.constant 0 : i32
    %c0_i32_1 = arith.constant 0 : i32
    return %c0_i32, %c0_i32_0 : i32, i32
  }
  func.func @transform_5(%arg0: i32, %arg1: i32) -> (i32, i32) {
    %c0_i32 = arith.constant 0 : i32
    %c0_i32_0 = arith.constant 0 : i32
    %c0_i32_1 = arith.constant 0 : i32
    return %c0_i32, %c0_i32_0 : i32, i32
  }
  func.func @transform_6(%arg0: i32, %arg1: i32) -> (i32, i32) {
    %c0_i32 = arith.constant 0 : i32
    %c0_i32_0 = arith.constant 0 : i32
    %c0_i32_1 = arith.constant 0 : i32
    return %c0_i32, %c0_i32_0 : i32, i32
  }
  func.func @transform_7(%arg0: i32, %arg1: i32) -> (i32, i32) {
    %c0_i32 = arith.constant 0 : i32
    %c0_i32_0 = arith.constant 0 : i32
    %c0_i32_1 = arith.constant 0 : i32
    return %c0_i32, %c0_i32_0 : i32, i32
  }
  func.func @transform_8(%arg0: i32, %arg1: i32) -> (i32, i32) {
    %c0_i32 = arith.constant 0 : i32
    %c0_i32_0 = arith.constant 0 : i32
    %c0_i32_1 = arith.constant 0 : i32
    return %c0_i32, %c0_i32_0 : i32, i32
  }
  func.func @transform_9(%arg0: i32, %arg1: i32) -> (i32, i32) {
    %c0_i32 = arith.constant 0 : i32
    %c0_i32_0 = arith.constant 0 : i32
    %c0_i32_1 = arith.constant 0 : i32
    return %c0_i32, %c0_i32_0 : i32, i32
  }
  func.func @transform_10(%arg0: i32, %arg1: i32) -> (i32, i32, i32) {
    %c0_i32 = arith.constant 0 : i32
    %c0_i32_0 = arith.constant 0 : i32
    return %arg0, %arg1, %c0_i32 : i32, i32, i32
  }
}

</mosaic_0001>

<llo_original>
// kernel: tpu_custom_call.1
$region0: #{tpu_custom_call.1}
  #allocation0 [shape = 'u32[]', space=smem, size = 0x4, offset = 0x4, fixed_abs, tag = 'smem constant byte address 0x4 - core index']
  #allocation1 [shape = 'u32[72,128]{1,0:T(1,128)}', space=vmem, size = 0x9000, scoped, tag = 'internal scratch']
  %s0 = inlined_call_operand.hbm [shape: f32[2,8,32], index: 0, kind: input, shape index: {}]
  %s1 = inlined_call_operand.hbm [shape: f32[2,8,32], index: 1, kind: input, shape index: {}]
  %s2 = inlined_call_operand.vmem [shape: f32[1,32], index: 2, kind: input, shape index: {}]
  %s3 = inlined_call_operand.vmem [shape: f32[1,32], index: 3, kind: input, shape index: {}]
  %s4 = inlined_call_operand.hbm [shape: bf16[32,32], index: 4, kind: input, shape index: {}]
  %s5 = inlined_call_operand.vmem [shape: f32[1,32], index: 5, kind: input, shape index: {}]
  %s6 = inlined_call_operand.hbm [shape: bf16[32,64], index: 6, kind: input, shape index: {}]
  %s7 = inlined_call_operand.vmem [shape: f32[1,64], index: 7, kind: input, shape index: {}]
  %s8 = inlined_call_operand.hbm [shape: bf16[32,32], index: 8, kind: input, shape index: {}]
  %s9 = inlined_call_operand.vmem [shape: f32[1,32], index: 9, kind: input, shape index: {}]
  %s10 = inlined_call_operand.hbm [shape: f32[2,8,32], index: 10, kind: output, shape index: {}]
  %s11 = sld [smem:[#allocation0]]
  $region93: #{tpu_custom_call.1} parent=0
    _
  %s13 = ssub.s32 1, %s11
  %s14 = scalar_select 0, %s13, %s11
  $region1: #{tpu_custom_call.1} parent=0
    #allocation2 [shape = 'u8[8192]{0}', space=vmem, size = 0x2000, scoped, tag = 'input window, operand 0']
    #allocation3 [shape = 's32[2]{0}', space=sflag, size = 0x8, scoped, tag = 'scoped memory for tpu_custom_call.1']
    #allocation4 [shape = 's32[2]{0}', space=sflag, size = 0x8, scoped, tag = 'scoped memory for tpu_custom_call.1']
    #allocation5 [shape = 'u8[8192]{0}', space=vmem, size = 0x2000, scoped, tag = 'input window, operand 1']
    #allocation6 [shape = 's32[2]{0}', space=sflag, size = 0x8, scoped, tag = 'scoped memory for tpu_custom_call.1']
    #allocation7 [shape = 'u8[8192]{0}', space=vmem, size = 0x2000, scoped, tag = 'input window, operand 4, single buffered']
    #allocation8 [shape = 'u8[8192]{0}', space=vmem, size = 0x2000, scoped, tag = 'input window, operand 6, single buffered']
    #allocation9 [shape = 's32[1]{0}', space=sflag, size = 0x4, scoped, tag = 'scoped memory for tpu_custom_call.1']
    #allocation10 [shape = 'u8[8192]{0}', space=vmem, size = 0x2000, scoped, tag = 'input window, operand 8, single buffered']
    #allocation11 [shape = 'u8[8192]{0}', space=vmem, size = 0x2000, scoped, tag = 'output window, operand 0']
    %15 = vsyncpa [#allocation3], 0
    %s16 = scalar_lea.sflag [#allocation3], 1
    %17 = vsyncpa %s16, 0
    %18 = vsyncpa [#allocation6], 0
    %s19 = scalar_lea.sflag [#allocation6], 1
    %20 = vsyncpa %s19, 0
    %21 = vsyncpa [#allocation9], 0
    %22 = vsyncpa [#allocation4], 0
    %s23 = scalar_lea.sflag [#allocation4], 1
    %24 = vsyncpa %s23, 0
    loop: start=0, step=1, limit=4
    $region2: #{tpu_custom_call.1} parent=1 // loop_pre_header
      _
    $region3: #{tpu_custom_call.1} parent=1 // loop_header
      %s26 = sphi 0, %s30
      %p27 = scmp.ge.s32.totalorder %s26, 4
      %s33 = sphi 0, %s45
      %s34 = sphi 0, %s41
      %s35 = sphi 0, %s33
      %s36 = sphi 0, %s34
      %s37 = sphi 0, %s35
      %s38 = sphi 0, %s36
      %s50 = sphi 0, %s52
      %s53 = sphi 0, %s50
      %s54 = sphi 0, %s53
      %s70 = sphi 0, %s54
      %s76 = sphi 0, %s78
      %s79 = sphi 0, %s76
      %s80 = sphi 0, %s79
      %s96 = sphi 0, %s80
      %s100 = sphi 0, %s100
      %s102 = sphi 0, %s100
      %s103 = sphi 0, %s102
      %s117 = sphi 0, %s103
      %s121 = sphi 0, %s121
      %s123 = sphi 0, %s121
      %s124 = sphi 0, %s123
      %s138 = sphi 0, %s124
      %s142 = sphi 0, %s142
      %s144 = sphi 0, %s142
      %s145 = sphi 0, %s144
      %s159 = sphi 0, %s145
      %s163 = sphi 0, %s163
      %s165 = sphi 0, %s163
      %s166 = sphi 0, %s165
      %s180 = sphi 0, %s166
      %s184 = sphi 0, %s184
      %s186 = sphi 0, %s184
      %s187 = sphi 0, %s186
      %s201 = sphi 0, %s187
      %s205 = sphi 0, %s205
      %s207 = sphi 0, %s205
      %s208 = sphi 0, %s207
      %s222 = sphi 0, %s208
      %s226 = sphi 0, %s226
      %s228 = sphi 0, %s226
      %s229 = sphi 0, %s228
      %s243 = sphi 0, %s229
      %s247 = sphi 0, %s247
      %s249 = sphi 0, %s247
      %s250 = sphi 0, %s249
      %s264 = sphi 0, %s250
      %s272 = sphi 0, %s274
      %s275 = sphi 0, %s272
      %s276 = sphi 0, %s275
      %s292 = sphi 0, %s276
    $region4: #{tpu_custom_call.1} parent=1 // loop_header_branch
      %29 = sbr.rel (%p27) target = $region8
    $region5: #{tpu_custom_call.1} parent=1 // loop_body
      %s31 = ssub.s32 %s26, 1
      %s32 = ssub.s32 %s26, 2
      %s39 = sadd.s32 1, %s34
      %p40 = scmp.ge.s32.totalorder %s39, 1
      %s41 = scalar_select %p40, 0, %s39
      %s42 = sadd.s32 1, %s33
      %s43 = scalar_select %p40, %s42, %s33
      %p44 = scmp.ge.s32.totalorder %s43, 2
      %s45 = scalar_select %p44, 0, %s43
      %s46 = ssub.s32 %s33, %s45
      %s47 = ssub.s32 %s34, %s41
      %s48 = sor.u32 %s46, %s47
      %p49 = scmp.eq.s32.totalorder %s48, 0
      %s51 = sadd.s32 %s50, 1
      %s52 = scalar_select %p49, %s50, %s51
      %p55 = pneg %p49
      %p56 = scmp.eq.s32.totalorder %s26, 1
      %p57 = por %p55, %p56
      %p58 = scmp.ne.s32.totalorder %s50, %s53
      %p59 = scmp.eq.s32.totalorder %s26, 0
      %p60 = por %p58, %p59
      %p61 = scmp.ne.s32.totalorder %s50, %s53
      %p62 = scmp.eq.s32.totalorder %s31, 1
      %p63 = por %p61, %p62
      %p64 = scmp.ne.s32.totalorder %s53, %s54
      %p65 = scmp.eq.s32.totalorder %s31, 0
      %p66 = por %p64, %p65
      %p67 = scmp.ne.s32.totalorder %s53, %s54
      %p68 = scmp.eq.s32.totalorder %s32, 1
      %p69 = por %p67, %p68
      %p71 = scmp.ne.s32.totalorder %s54, %s70
      %p72 = scmp.eq.s32.totalorder %s32, 0
      %p73 = por %p71, %p72
      %s74 = ssub.s32 %s33, %s45
      %p75 = scmp.eq.s32.totalorder %s74, 0
      %s77 = sadd.s32 %s76, 1
      %s78 = scalar_select %p75, %s76, %s77
      %p81 = pneg %p75
      %p82 = scmp.eq.s32.totalorder %s26, 1
      %p83 = por %p81, %p82
      %p84 = scmp.ne.s32.totalorder %s76, %s79
      %p85 = scmp.eq.s32.totalorder %s26, 0
      %p86 = por %p84, %p85
      %p87 = scmp.ne.s32.totalorder %s76, %s79
      %p88 = scmp.eq.s32.totalorder %s31, 1
      %p89 = por %p87, %p88
      %p90 = scmp.ne.s32.totalorder %s79, %s80
      %p91 = scmp.eq.s32.totalorder %s31, 0
      %p92 = por %p90, %p91
      %p93 = scmp.ne.s32.totalorder %s79, %s80
      %p94 = scmp.eq.s32.totalorder %s32, 1
      %p95 = por %p93, %p94
      %p97 = scmp.ne.s32.totalorder %s80, %s96
      %p98 = scmp.eq.s32.totalorder %s32, 0
      %p99 = por %p97, %p98
      %s101 = sadd.s32 %s100, 1
      %p104 = scmp.eq.s32.totalorder %s26, 1
      %p105 = scmp.ne.s32.totalorder %s100, %s102
      %p106 = scmp.eq.s32.totalorder %s26, 0
      %p107 = por %p105, %p106
      %p108 = scmp.ne.s32.totalorder %s100, %s102
      %p109 = scmp.eq.s32.totalorder %s31, 1
      %p110 = por %p108, %p109
      %p111 = scmp.ne.s32.totalorder %s102, %s103
      %p112 = scmp.eq.s32.totalorder %s31, 0
      %p113 = por %p111, %p112
      %p114 = scmp.ne.s32.totalorder %s102, %s103
      %p115 = scmp.eq.s32.totalorder %s32, 1
      %p116 = por %p114, %p115
      %p118 = scmp.ne.s32.totalorder %s103, %s117
      %p119 = scmp.eq.s32.totalorder %s32, 0
      %p120 = por %p118, %p119
      %s122 = sadd.s32 %s121, 1
      %p125 = scmp.eq.s32.totalorder %s26, 1
      %p126 = scmp.ne.s32.totalorder %s121, %s123
      %p127 = scmp.eq.s32.totalorder %s26, 0
      %p128 = por %p126, %p127
      %p129 = scmp.ne.s32.totalorder %s121, %s123
      %p130 = scmp.eq.s32.totalorder %s31, 1
      %p131 = por %p129, %p130
      %p132 = scmp.ne.s32.totalorder %s123, %s124
      %p133 = scmp.eq.s32.totalorder %s31, 0
      %p134 = por %p132, %p133
      %p135 = scmp.ne.s32.totalorder %s123, %s124
      %p136 = scmp.eq.s32.totalorder %s32, 1
      %p137 = por %p135, %p136
      %p139 = scmp.ne.s32.totalorder %s124, %s138
      %p140 = scmp.eq.s32.totalorder %s32, 0
      %p141 = por %p139, %p140
      %s143 = sadd.s32 %s142, 1
      %p146 = scmp.eq.s32.totalorder %s26, 1
      %p147 = scmp.ne.s32.totalorder %s142, %s144
      %p148 = scmp.eq.s32.totalorder %s26, 0
      %p149 = por %p147, %p148
      %p150 = scmp.ne.s32.totalorder %s142, %s144
      %p151 = scmp.eq.s32.totalorder %s31, 1
      %p152 = por %p150, %p151
      %p153 = scmp.ne.s32.totalorder %s144, %s145
      %p154 = scmp.eq.s32.totalorder %s31, 0
      %p155 = por %p153, %p154
      %p156 = scmp.ne.s32.totalorder %s144, %s145
      %p157 = scmp.eq.s32.totalorder %s32, 1
      %p158 = por %p156, %p157
      %p160 = scmp.ne.s32.totalorder %s145, %s159
      %p161 = scmp.eq.s32.totalorder %s32, 0
      %p162 = por %p160, %p161
      %s164 = sadd.s32 %s163, 1
      %p167 = scmp.eq.s32.totalorder %s26, 1
      %p168 = scmp.ne.s32.totalorder %s163, %s165
      %p169 = scmp.eq.s32.totalorder %s26, 0
      %p170 = por %p168, %p169
      %p171 = scmp.ne.s32.totalorder %s163, %s165
      %p172 = scmp.eq.s32.totalorder %s31, 1
      %p173 = por %p171, %p172
      %p174 = scmp.ne.s32.totalorder %s165, %s166
      %p175 = scmp.eq.s32.totalorder %s31, 0
      %p176 = por %p174, %p175
      %p177 = scmp.ne.s32.totalorder %s165, %s166
      %p178 = scmp.eq.s32.totalorder %s32, 1
      %p179 = por %p177, %p178
      %p181 = scmp.ne.s32.totalorder %s166, %s180
      %p182 = scmp.eq.s32.totalorder %s32, 0
      %p183 = por %p181, %p182
      %s185 = sadd.s32 %s184, 1
      %p188 = scmp.eq.s32.totalorder %s26, 1
      %p189 = scmp.ne.s32.totalorder %s184, %s186
      %p190 = scmp.eq.s32.totalorder %s26, 0
      %p191 = por %p189, %p190
      %p192 = scmp.ne.s32.totalorder %s184, %s186
      %p193 = scmp.eq.s32.totalorder %s31, 1
      %p194 = por %p192, %p193
      %p195 = scmp.ne.s32.totalorder %s186, %s187
      %p196 = scmp.eq.s32.totalorder %s31, 0
      %p197 = por %p195, %p196
      %p198 = scmp.ne.s32.totalorder %s186, %s187
      %p199 = scmp.eq.s32.totalorder %s32, 1
      %p200 = por %p198, %p199
      %p202 = scmp.ne.s32.totalorder %s187, %s201
      %p203 = scmp.eq.s32.totalorder %s32, 0
      %p204 = por %p202, %p203
      %s206 = sadd.s32 %s205, 1
      %p209 = scmp.eq.s32.totalorder %s26, 1
      %p210 = scmp.ne.s32.totalorder %s205, %s207
      %p211 = scmp.eq.s32.totalorder %s26, 0
      %p212 = por %p210, %p211
      %p213 = scmp.ne.s32.totalorder %s205, %s207
      %p214 = scmp.eq.s32.totalorder %s31, 1
      %p215 = por %p213, %p214
      %p216 = scmp.ne.s32.totalorder %s207, %s208
      %p217 = scmp.eq.s32.totalorder %s31, 0
      %p218 = por %p216, %p217
      %p219 = scmp.ne.s32.totalorder %s207, %s208
      %p220 = scmp.eq.s32.totalorder %s32, 1
      %p221 = por %p219, %p220
      %p223 = scmp.ne.s32.totalorder %s208, %s222
      %p224 = scmp.eq.s32.totalorder %s32, 0
      %p225 = por %p223, %p224
      %s227 = sadd.s32 %s226, 1
      %p230 = scmp.eq.s32.totalorder %s26, 1
      %p231 = scmp.ne.s32.totalorder %s226, %s228
      %p232 = scmp.eq.s32.totalorder %s26, 0
      %p233 = por %p231, %p232
      %p234 = scmp.ne.s32.totalorder %s226, %s228
      %p235 = scmp.eq.s32.totalorder %s31, 1
      %p236 = por %p234, %p235
      %p237 = scmp.ne.s32.totalorder %s228, %s229
      %p238 = scmp.eq.s32.totalorder %s31, 0
      %p239 = por %p237, %p238
      %p240 = scmp.ne.s32.totalorder %s228, %s229
      %p241 = scmp.eq.s32.totalorder %s32, 1
      %p242 = por %p240, %p241
      %p244 = scmp.ne.s32.totalorder %s229, %s243
      %p245 = scmp.eq.s32.totalorder %s32, 0
      %p246 = por %p244, %p245
      %s248 = sadd.s32 %s247, 1
      %p251 = scmp.eq.s32.totalorder %s26, 1
      %p252 = scmp.ne.s32.totalorder %s247, %s249
      %p253 = scmp.eq.s32.totalorder %s26, 0
      %p254 = por %p252, %p253
      %p255 = scmp.ne.s32.totalorder %s247, %s249
      %p256 = scmp.eq.s32.totalorder %s31, 1
      %p257 = por %p255, %p256
      %p258 = scmp.ne.s32.totalorder %s249, %s250
      %p259 = scmp.eq.s32.totalorder %s31, 0
      %p260 = por %p258, %p259
      %p261 = scmp.ne.s32.totalorder %s249, %s250
      %p262 = scmp.eq.s32.totalorder %s32, 1
      %p263 = por %p261, %p262
      %p265 = scmp.ne.s32.totalorder %s250, %s264
      %p266 = scmp.eq.s32.totalorder %s32, 0
      %p267 = por %p265, %p266
      %s268 = ssub.s32 %s33, %s45
      %s269 = ssub.s32 %s34, %s41
      %s270 = sor.u32 %s268, %s269
      %p271 = scmp.eq.s32.totalorder %s270, 0
      %s273 = sadd.s32 %s272, 1
      %s274 = scalar_select %p271, %s272, %s273
      %p277 = pneg %p271
      %p278 = scmp.eq.s32.totalorder %s26, 1
      %p279 = por %p277, %p278
      %p280 = scmp.ne.s32.totalorder %s272, %s275
      %p281 = scmp.eq.s32.totalorder %s26, 0
      %p282 = por %p280, %p281
      %p283 = scmp.ne.s32.totalorder %s272, %s275
      %p284 = scmp.eq.s32.totalorder %s31, 1
      %p285 = por %p283, %p284
      %p286 = scmp.ne.s32.totalorder %s275, %s276
      %p287 = scmp.eq.s32.totalorder %s31, 0
      %p288 = por %p286, %p287
      %p289 = scmp.ne.s32.totalorder %s275, %s276
      %p290 = scmp.eq.s32.totalorder %s32, 1
      %p291 = por %p289, %p290
      %p293 = scmp.ne.s32.totalorder %s276, %s292
      %p294 = scmp.eq.s32.totalorder %s32, 0
      %p295 = por %p293, %p294
      %p296 = scmp.le.s32.totalorder 1, %s26
      %p297 = scmp.lt.s32.totalorder %s26, 3
      %p298 = pnand %p296, %p297
      %p299 = pneg %p298
      // Predicated region
      $region9: #{tpu_custom_call.1} parent=5 // pred_check
        _
      $region10: #{tpu_custom_call.1} parent=5 // pred_check_branch
        %301 = sbr.rel (%p298) target = $region12
      $region11: #{tpu_custom_call.1} parent=5 // pred_region
        %s302 = ssub.s32 %s26, 1
        // Predicated region
        $region13: #{tpu_custom_call.1} parent=11 // pred_check
          %p303 = pneg %p113
        $region14: #{tpu_custom_call.1} parent=11 // pred_check_branch
          %305 = sbr.rel (%p303) target = $region16
        $region15: #{tpu_custom_call.1} parent=11 // pred_region
          _
        $region16: #{tpu_custom_call.1} parent=11 // pred_fallthru
          _
        // Predicated region
        $region17: #{tpu_custom_call.1} parent=11 // pred_check
          %p306 = pneg %p134
        $region18: #{tpu_custom_call.1} parent=11 // pred_check_branch
          %308 = sbr.rel (%p306) target = $region20
        $region19: #{tpu_custom_call.1} parent=11 // pred_region
          _
        $region20: #{tpu_custom_call.1} parent=11 // pred_fallthru
          _
        // Predicated region
        $region21: #{tpu_custom_call.1} parent=11 // pred_check
          %p309 = pneg %p155
        $region22: #{tpu_custom_call.1} parent=11 // pred_check_branch
          %311 = sbr.rel (%p309) target = $region24
        $region23: #{tpu_custom_call.1} parent=11 // pred_region
          %313 = vsyncadd [#allocation6], 0
          %s314 = sshll.u32 %s4, 4
          %s315 = int_to_ptr.hbm [resolvable:$true] %s314
          %s316 = sshll.u32 [#allocation7], 4
          %s317 = int_to_ptr.vmem [resolvable:$true] %s316
          %322 = dma.hbm_to_vmem [thread:$0]  %s315, 256, %s317, [#allocation6], 64, 64, 4
        $region24: #{tpu_custom_call.1} parent=11 // pred_fallthru
          _
        // Predicated region
        $region25: #{tpu_custom_call.1} parent=11 // pred_check
          %p323 = pneg %p176
        $region26: #{tpu_custom_call.1} parent=11 // pred_check_branch
          %325 = sbr.rel (%p323) target = $region28
        $region27: #{tpu_custom_call.1} parent=11 // pred_region
          _
        $region28: #{tpu_custom_call.1} parent=11 // pred_fallthru
          _
        // Predicated region
        $region29: #{tpu_custom_call.1} parent=11 // pred_check
          %p326 = pneg %p197
        $region30: #{tpu_custom_call.1} parent=11 // pred_check_branch
          %328 = sbr.rel (%p326) target = $region32
        $region31: #{tpu_custom_call.1} parent=11 // pred_region
          %330 = vsyncadd [#allocation9], 0
          %s331 = sshll.u32 %s6, 4
          %s332 = int_to_ptr.hbm [resolvable:$true] %s331
          %s333 = sshll.u32 [#allocation8], 4
          %s334 = int_to_ptr.vmem [resolvable:$true] %s333
          %339 = dma.hbm_to_vmem [thread:$0]  %s332, 256, %s334, [#allocation9], 64, 64, 4
        $region32: #{tpu_custom_call.1} parent=11 // pred_fallthru
          _
        // Predicated region
        $region33: #{tpu_custom_call.1} parent=11 // pred_check
          %p340 = pneg %p218
        $region34: #{tpu_custom_call.1} parent=11 // pred_check_branch
          %342 = sbr.rel (%p340) target = $region36
        $region35: #{tpu_custom_call.1} parent=11 // pred_region
          _
        $region36: #{tpu_custom_call.1} parent=11 // pred_fallthru
          _
        // Predicated region
        $region37: #{tpu_custom_call.1} parent=11 // pred_check
          %p343 = pneg %p239
        $region38: #{tpu_custom_call.1} parent=11 // pred_check_branch
          %345 = sbr.rel (%p343) target = $region40
        $region39: #{tpu_custom_call.1} parent=11 // pred_region
          %347 = vsyncadd [#allocation9], 0
          %s348 = sshll.u32 %s8, 4
          %s349 = int_to_ptr.hbm [resolvable:$true] %s348
          %s350 = sshll.u32 [#allocation10], 4
          %s351 = int_to_ptr.vmem [resolvable:$true] %s350
          %356 = dma.hbm_to_vmem [thread:$0]  %s349, 256, %s351, [#allocation9], 64, 64, 4
        $region40: #{tpu_custom_call.1} parent=11 // pred_fallthru
          _
        // Predicated region
        $region41: #{tpu_custom_call.1} parent=11 // pred_check
          %p357 = pneg %p260
        $region42: #{tpu_custom_call.1} parent=11 // pred_check_branch
          %359 = sbr.rel (%p357) target = $region44
        $region43: #{tpu_custom_call.1} parent=11 // pred_region
          _
        $region44: #{tpu_custom_call.1} parent=11 // pred_fallthru
          _
      $region12: #{tpu_custom_call.1} parent=5 // pred_fallthru
        _
      %p360 = scmp.lt.s32.totalorder %s26, 2
      // Predicated region
      $region45: #{tpu_custom_call.1} parent=5 // pred_check
        %p361 = pneg %p360
      $region46: #{tpu_custom_call.1} parent=5 // pred_check_branch
        %363 = sbr.rel (%p361) target = $region48
      $region47: #{tpu_custom_call.1} parent=5 // pred_region
        // Predicated region
        $region49: #{tpu_custom_call.1} parent=47 // pred_check
          %p364 = pneg %p60
        $region50: #{tpu_custom_call.1} parent=47 // pred_check_branch
          %366 = sbr.rel (%p364) target = $region52
        $region51: #{tpu_custom_call.1} parent=47 // pred_region
          %s367 = sand.u32 %s50, 1
          %s368 = scalar_lea.sflag [#allocation3], %s367
          %s369 = sand.u32 %s50, 1
          %s370 = smul.addr %s369, 8
          %s371 = scalar_lea.vmem [#allocation2], %s370
          %373 = vsyncadd %s368, 0
          %s374 = sadd.s32 %s34, %s33
          %s375 = smul.addr %s374, 8
          %s376 = scalar_lea.hbm %s0, %s375
          %s378 = sshll.u32 %s376, 4
          %s379 = int_to_ptr.hbm [resolvable:$true] %s378
          %s380 = sshll.u32 %s371, 4
          %s381 = int_to_ptr.vmem [resolvable:$true] %s380
          %383 = dma.hbm_to_vmem [thread:$0]  %s379, 128, %s381, %s368
        $region52: #{tpu_custom_call.1} parent=47 // pred_fallthru
          _
        // Predicated region
        $region53: #{tpu_custom_call.1} parent=47 // pred_check
          %p384 = pneg %p86
        $region54: #{tpu_custom_call.1} parent=47 // pred_check_branch
          %386 = sbr.rel (%p384) target = $region56
        $region55: #{tpu_custom_call.1} parent=47 // pred_region
          %s387 = sand.u32 %s26, 1
          %s388 = scalar_lea.sflag [#allocation6], %s387
          %s389 = sand.u32 %s76, 1
          %s390 = smul.addr %s389, 8
          %s391 = scalar_lea.vmem [#allocation5], %s390
          %393 = vsyncadd %s388, 0
          %s394 = smul.addr %s33, 8
          %s395 = scalar_lea.hbm %s1, %s394
          %s397 = sshll.u32 %s395, 4
          %s398 = int_to_ptr.hbm [resolvable:$true] %s397
          %s399 = sshll.u32 %s391, 4
          %s400 = int_to_ptr.vmem [resolvable:$true] %s399
          %402 = dma.hbm_to_vmem [thread:$0]  %s398, 128, %s400, %s388
        $region56: #{tpu_custom_call.1} parent=47 // pred_fallthru
          _
      $region48: #{tpu_custom_call.1} parent=5 // pred_fallthru
        _
      %p403 = scmp.le.s32.totalorder 1, %s26
      %p404 = scmp.lt.s32.totalorder %s26, 3
      %p405 = pnand %p403, %p404
      %p406 = pneg %p405
      // Predicated region
      $region57: #{tpu_custom_call.1} parent=5 // pred_check
        _
      $region58: #{tpu_custom_call.1} parent=5 // pred_check_branch
        %408 = sbr.rel (%p405) target = $region60
      $region59: #{tpu_custom_call.1} parent=5 // pred_region
        %s409 = ssub.s32 %s26, 1
        %s410 = sand.u32 %s53, 1
        %s411 = scalar_lea.sflag [#allocation3], %s410
        %s412 = sand.u32 %s53, 1
        %s413 = smul.addr %s412, 8
        %s414 = scalar_lea.vmem [#allocation2], %s413
        // Predicated region
        $region61: #{tpu_custom_call.1} parent=59 // pred_check
          %p415 = pneg %p66
        $region62: #{tpu_custom_call.1} parent=59 // pred_check_branch
          %417 = sbr.rel (%p415) target = $region64
        $region63: #{tpu_custom_call.1} parent=59 // pred_region
          %419 = dma.done %s411, 128
        $region64: #{tpu_custom_call.1} parent=59 // pred_fallthru
          _
        %s420 = sand.u32 %s31, 1
        %s421 = scalar_lea.sflag [#allocation6], %s420
        %s422 = sand.u32 %s79, 1
        %s423 = smul.addr %s422, 8
        %s424 = scalar_lea.vmem [#allocation5], %s423
        // Predicated region
        $region65: #{tpu_custom_call.1} parent=59 // pred_check
          %p425 = pneg %p92
        $region66: #{tpu_custom_call.1} parent=59 // pred_check_branch
          %427 = sbr.rel (%p425) target = $region68
        $region67: #{tpu_custom_call.1} parent=59 // pred_region
          %429 = dma.done %s421, 128
        $region68: #{tpu_custom_call.1} parent=59 // pred_fallthru
          _
        // Predicated region
        $region69: #{tpu_custom_call.1} parent=59 // pred_check
          %p430 = pneg %p155
        $region70: #{tpu_custom_call.1} parent=59 // pred_check_branch
          %432 = sbr.rel (%p430) target = $region72
        $region71: #{tpu_custom_call.1} parent=59 // pred_region
          %434 = dma.done [#allocation6], 256
        $region72: #{tpu_custom_call.1} parent=59 // pred_fallthru
          _
        // Predicated region
        $region73: #{tpu_custom_call.1} parent=59 // pred_check
          %p435 = pneg %p197
        $region74: #{tpu_custom_call.1} parent=59 // pred_check_branch
          %437 = sbr.rel (%p435) target = $region76
        $region75: #{tpu_custom_call.1} parent=59 // pred_region
          %439 = dma.done [#allocation9], 256
        $region76: #{tpu_custom_call.1} parent=59 // pred_fallthru
          _
        // Predicated region
        $region77: #{tpu_custom_call.1} parent=59 // pred_check
          %p440 = pneg %p239
        $region78: #{tpu_custom_call.1} parent=59 // pred_check_branch
          %442 = sbr.rel (%p440) target = $region80
        $region79: #{tpu_custom_call.1} parent=59 // pred_region
          %444 = dma.done [#allocation9], 256
        $region80: #{tpu_custom_call.1} parent=59 // pred_fallthru
          _
        %s445 = sand.u32 %s53, 1
        %s446 = scalar_lea.sflag [#allocation3], %s445
        %s447 = sand.u32 %s53, 1
        %s448 = smul.addr %s447, 8
        %s449 = scalar_lea.vmem [#allocation2], %s448
        %p450 = pneg %p66
        %p451 = pneg %p63
        %s452 = sand.u32 %s31, 1
        %s453 = scalar_lea.sflag [#allocation6], %s452
        %s454 = sand.u32 %s79, 1
        %s455 = smul.addr %s454, 8
        %s456 = scalar_lea.vmem [#allocation5], %s455
        %p457 = pneg %p92
        %p458 = pneg %p89
        %p459 = pneg %p113
        %p460 = pneg %p110
        %p461 = pneg %p134
        %p462 = pneg %p131
        %p463 = pneg %p155
        %p464 = pneg %p152
        %p465 = pneg %p176
        %p466 = pneg %p173
        %p467 = pneg %p197
        %p468 = pneg %p194
        %p469 = pneg %p218
        %p470 = pneg %p215
        %p471 = pneg %p239
        %p472 = pneg %p236
        %p473 = pneg %p260
        %p474 = pneg %p257
        %p475 = pneg %p288
        %p476 = pneg %p285
        %s477 = sand.u32 %s275, 1
        %s478 = scalar_lea.sflag [#allocation4], %s477
        %s479 = sand.u32 %s275, 1
        %s480 = smul.addr %s479, 8
        %s481 = scalar_lea.vmem [#allocation11], %s480
        %v483 = vld [vmem:[%s2] sm:$0x1]
        %v484 = vld [vmem:[%s3] sm:$0x1]
        %v485 = vld [vmem:[%s414] sm:$0xff]
        %vm486 = vcmask 261120
        %v487 = vsel %vm486, %v485, 0.0
        %488 = vadd.xlane.f32.xlu0 %v487
        %v489 = vpop.xlane.xlu0 %488
        %v490 = vrcp.pop 32.0
        %v491 = vmul.f32 32.0, %v490
        %v492 = vsub.f32 1.0, %v491
        %v493 = vmul.f32 %v490, %v492
        %v494 = vadd.f32 %v490, %v493
        %vm495 = vweird.f32 %v490
        %v496 = vsel %vm495, %v490, %v494
        %v497 = vmul.f32 %v489, %v496
        %v498 = vsub.f32 %v485, %v497
        %v499 = vmul.f32 %v498, %v498
        %v500 = vsel %vm486, %v499, 0.0
        %501 = vadd.xlane.f32.xlu0 %v500
        %v502 = vpop.xlane.xlu0 %501
        %v503 = vmul.f32 %v502, %v496
        %v504 = vadd.f32 %v503, 1e-05
        %v505 = vrsqrt.pop %v504
        %v506 = vmul.f32 %v505, %v504
        %v507 = vmul.f32 %v506, %v505
        %v508 = vmul.f32 0.5, %v507
        %v509 = vsub.f32 1.5, %v508
        %v510 = vmul.f32 %v505, %v509
        %vm511 = vweird.f32 %v504
        %vm512 = vweird.f32 %v505
        %vm513 = vmor %vm511, %vm512
        %v514 = vsel %vm513, %v505, %v510
        %v515 = vmul.f32 %v498, %v514
        %v517 = vperm.slane %v483, 0
        %v519 = vmul.f32 %v515, %v517
        %v521 = vperm.slane %v484, 0
        %v523 = vadd.f32 %v519, %v521
        %v524 = vpack.c.bf16 %v523, %v523
        %v525 = vld [vmem:[#allocation7] sm:$0xf]
        %v526 = vld [vmem:[#allocation7 + $0x4] sm:$0xf]
        %v527 = vld [vmem:[#allocation7 + $0x8] sm:$0xf]
        %v528 = vld [vmem:[#allocation7 + $0xc] sm:$0xf]
        %v529 = vld [vmem:[%s5] sm:$0x1]
        %v531 = vperm.slane %v529, 0
        %v537 = vunpack.c.l.b16 %v525
        %v538 = vunpack.c.l.b16 %v526
        %v539 = vunpack.c.l.b16 %v527
        %v540 = vunpack.c.l.b16 %v528
        %v541 = vpack.c.b16 %v538, %v537
        %v542 = vpack.c.b16 %v540, %v539
        %v546 = vsel %vm486, %v524, 0
        %548 = vmatpush.bf16.msra.mxu0 0
        %549 = vmatpush.bf16.msra.mxu0 0
        %550 = vmatpush.bf16.msra.mxu0 0
        %551 = vmatpush.bf16.msra.mxu0 0
        %552 = vmatpush.bf16.msra.mxu0 0
        %553 = vmatpush.bf16.msra.mxu0 0
        %554 = vmatpush.bf16.msra.mxu0 %v542
        %555 = vmatpush.bf16.msra.mxu0 %v541
        %556 = vmatmul.bf16.gmra.mxu0 %v546
        %v557 = vpop.f32.mrf.mxu0
        %v558 = vadd.f32 %v531, %v557
        %v559 = vpop.f32.mrf.mxu0
        %560 = vdwg.mxu0
        %v561 = vmul.f32 %v558, 0.35355338
        %v562 = vpack.c.bf16 %v561, %v561
        %v563 = vld [vmem:[%s424] sm:$0xff]
        %v564 = vsel %vm486, %v563, 0.0
        %565 = vadd.xlane.f32.xlu0 %v564
        %v566 = vpop.xlane.xlu0 %565
        %v567 = vmul.f32 %v566, %v496
        %v568 = vsub.f32 %v563, %v567
        %v569 = vmul.f32 %v568, %v568
        %v570 = vsel %vm486, %v569, 0.0
        %571 = vadd.xlane.f32.xlu0 %v570
        %v572 = vpop.xlane.xlu0 %571
        %v573 = vmul.f32 %v572, %v496
        %v574 = vadd.f32 %v573, 1e-05
        %v575 = vrsqrt.pop %v574
        %v576 = vmul.f32 %v575, %v574
        %v577 = vmul.f32 %v576, %v575
        %v578 = vmul.f32 0.5, %v577
        %v579 = vsub.f32 1.5, %v578
        %v580 = vmul.f32 %v575, %v579
        %vm581 = vweird.f32 %v574
        %vm582 = vweird.f32 %v575
        %vm583 = vmor %vm581, %vm582
        %v584 = vsel %vm583, %v575, %v580
        %v585 = vmul.f32 %v568, %v584
        %v586 = vmul.f32 %v585, %v517
        %v587 = vadd.f32 %v586, %v521
        %v588 = vpack.c.bf16 %v587, %v587
        %v589 = vld [vmem:[#allocation8] sm:$0xf]
        %v590 = vld [vmem:[#allocation8 + $0x4] sm:$0xf]
        %v591 = vld [vmem:[#allocation8 + $0x8] sm:$0xf]
        %v592 = vld [vmem:[#allocation8 + $0xc] sm:$0xf]
        %v593 = vld [vmem:[%s7] sm:$0x1]
        %v595 = vperm.slane %v593, 0
        %v601 = vunpack.c.l.b16 %v589
        %v602 = vunpack.c.l.b16 %v590
        %v603 = vunpack.c.l.b16 %v591
        %v604 = vunpack.c.l.b16 %v592
        %v605 = vpack.c.b16 %v602, %v601
        %v606 = vpack.c.b16 %v604, %v603
        %v610 = vsel %vm486, %v588, 0
        %612 = vmatpush.bf16.msra.mxu0 0
        %613 = vmatpush.bf16.msra.mxu0 0
        %614 = vmatpush.bf16.msra.mxu0 0
        %615 = vmatpush.bf16.msra.mxu0 0
        %616 = vmatpush.bf16.msra.mxu0 0
        %617 = vmatpush.bf16.msra.mxu0 0
        %618 = vmatpush.bf16.msra.mxu0 %v606
        %619 = vmatpush.bf16.msra.mxu0 %v605
        %620 = vmatmul.bf16.gmra.mxu0 %v610
        %v621 = vpop.f32.mrf.mxu0
        %v622 = vadd.f32 %v595, %v621
        %v623 = vpop.f32.mrf.mxu0
        %624 = vdwg.mxu0
        %v625 = vpack.c.bf16 %v622, %v622
        %s626 = smul.u32 %s36, 8
        %v627 = vlaneseq
        %v628 = vshrl.u32 %v627, 7
        %v629 = vstv %s626
        %v630 = vadd.s32 %v629, %v628
        %v631 = vlaneseq
        %v632 = vand.u32 %v631, 127
        %vm633 = vcmp.gt.s32.totalorder %v632, %v630
        %v634 = vsel %vm633, -1e+09, 0.0
        %v635 = vld [vmem:[#allocation10] sm:$0xf]
        %v636 = vld [vmem:[#allocation10 + $0x4] sm:$0xf]
        %v637 = vld [vmem:[#allocation10 + $0x8] sm:$0xf]
        %v638 = vld [vmem:[#allocation10 + $0xc] sm:$0xf]
        %vm639 = vcmask 64512
        %v641 = vsel %vm639, %v562, 0
        %v644 = vsel %vm639, %v625, 0
        %646 = vmatpush.bf16.xpose.msra.mxu0 0
        %647 = vmatpush.bf16.xpose.msra.mxu0 0
        %648 = vmatpush.bf16.xpose.msra.mxu0 0
        %649 = vmatpush.bf16.xpose.msra.mxu0 0
        %650 = vmatpush.bf16.xpose.msra.mxu0 0
        %651 = vmatpush.bf16.xpose.msra.mxu0 0
        %652 = vmatpush.bf16.xpose.msra.mxu0 0
        %653 = vmatpush.bf16.xpose.msra.mxu0 %v644
        %654 = vmatmul.bf16.gmra.mxu0 %v641
        %v655 = vpop.f32.mrf.mxu0
        %v656 = vadd.f32 %v634, %v655
        %v657 = vpop.f32.mrf.mxu0
        %658 = vdwg.mxu0
        %v659 = vsel %vm639, %v656, -inf
        %660 = vmax.xlane.f32.xlu0 %v659
        %v661 = vpop.xlane.xlu0 %660
        %v662 = vsub.f32 %v656, %v661
        %v663 = vmul.f32 %v662, 1.442695
        %v664 = vpow.pop %v663
        %v665 = vsel %vm639, %v664, 0.0
        %666 = vadd.xlane.f32.xlu0 %v665
        %v667 = vpop.xlane.xlu0 %666
        %v668 = vrcp.pop %v667
        %v669 = vmul.f32 %v664, %v668
        %v670 = vpack.c.bf16 %v669, %v669
        %v672 = vunpack.c.l.b16 %v625
        %v673 = vpack.c.b16 %v672, %v672
        %674 = vrot.lane.b32.xlu0 %v673, 96
        %v675 = vpop.permute.xlu0 %674
        %v677 = vsel %vm639, %v670, 0
        %vm679 = vcmask 1043456
        %v681 = vsel %vm679, %v675, 0
        %683 = vmatpush.bf16.msra.mxu0 0
        %684 = vmatpush.bf16.msra.mxu0 0
        %685 = vmatpush.bf16.msra.mxu0 0
        %686 = vmatpush.bf16.msra.mxu0 0
        %687 = vmatpush.bf16.msra.mxu0 0
        %688 = vmatpush.bf16.msra.mxu0 0
        %689 = vmatpush.bf16.msra.mxu0 0
        %690 = vmatpush.bf16.msra.mxu0 %v681
        %691 = vmatmul.bf16.gmra.mxu0 %v677
        %v692 = vpop.f32.mrf.mxu0
        %v693 = vadd.f32 0.0, %v692
        %v694 = vpop.f32.mrf.mxu0
        %695 = vdwg.mxu0
        %v696 = vpack.c.bf16 %v693, %v693
        %v698 = vunpack.c.l.b16 %v562
        %v699 = vpack.c.b16 %v698, %v698
        %700 = vrot.lane.b32.xlu0 %v699, 120
        %v701 = vpop.permute.xlu0 %700
        %702 = vrot.lane.b32.xlu0 %v673, 120
        %v703 = vpop.permute.xlu0 %702
        %v705 = vsel %vm639, %v701, 0
        %v708 = vsel %vm639, %v703, 0
        %710 = vmatpush.bf16.xpose.msra.mxu0 0
        %711 = vmatpush.bf16.xpose.msra.mxu0 0
        %712 = vmatpush.bf16.xpose.msra.mxu0 0
        %713 = vmatpush.bf16.xpose.msra.mxu0 0
        %714 = vmatpush.bf16.xpose.msra.mxu0 0
        %715 = vmatpush.bf16.xpose.msra.mxu0 0
        %716 = vmatpush.bf16.xpose.msra.mxu0 0
        %717 = vmatpush.bf16.xpose.msra.mxu0 %v708
        %718 = vmatmul.bf16.gmra.mxu0 %v705
        %v719 = vpop.f32.mrf.mxu0
        %v720 = vadd.f32 %v634, %v719
        %v721 = vpop.f32.mrf.mxu0
        %722 = vdwg.mxu0
        %v723 = vsel %vm639, %v720, -inf
        %724 = vmax.xlane.f32.xlu0 %v723
        %v725 = vpop.xlane.xlu0 %724
        %v726 = vsub.f32 %v720, %v725
        %v727 = vmul.f32 %v726, 1.442695
        %v728 = vpow.pop %v727
        %v729 = vsel %vm639, %v728, 0.0
        %730 = vadd.xlane.f32.xlu0 %v729
        %v731 = vpop.xlane.xlu0 %730
        %v732 = vrcp.pop %v731
        %v733 = vmul.f32 %v728, %v732
        %v734 = vpack.c.bf16 %v733, %v733
        %735 = vrot.lane.b32.xlu0 %v673, 88
        %v736 = vpop.permute.xlu0 %735
        %v738 = vsel %vm639, %v734, 0
        %v741 = vsel %vm679, %v736, 0
        %743 = vmatpush.bf16.msra.mxu0 0
        %744 = vmatpush.bf16.msra.mxu0 0
        %745 = vmatpush.bf16.msra.mxu0 0
        %746 = vmatpush.bf16.msra.mxu0 0
        %747 = vmatpush.bf16.msra.mxu0 0
        %748 = vmatpush.bf16.msra.mxu0 0
        %749 = vmatpush.bf16.msra.mxu0 0
        %750 = vmatpush.bf16.msra.mxu0 %v741
        %751 = vmatmul.bf16.gmra.mxu0 %v738
        %v752 = vpop.f32.mrf.mxu0
        %v753 = vadd.f32 0.0, %v752
        %v754 = vpop.f32.mrf.mxu0
        %755 = vdwg.mxu0
        %v756 = vpack.c.bf16 %v753, %v753
        %v758 = vsel %vm639, %v756, 0
        %v761 = vsel %vm679, %v636, 0
        %763 = vmatpush.bf16.msra.mxu0 0
        %764 = vmatpush.bf16.msra.mxu0 0
        %765 = vmatpush.bf16.msra.mxu0 0
        %766 = vmatpush.bf16.msra.mxu0 0
        %767 = vmatpush.bf16.msra.mxu0 0
        %768 = vmatpush.bf16.msra.mxu0 0
        %769 = vmatpush.bf16.msra.mxu0 0
        %770 = vmatpush.bf16.msra.mxu0 %v761
        %771 = vmatmul.bf16.gmra.mxu0 %v758
        %v772 = vpop.f32.mrf.mxu0
        %v773 = vadd.f32 0.0, %v772
        %v774 = vpop.f32.mrf.mxu0
        %775 = vdwg.mxu0
        %v777 = vsel %vm639, %v696, 0
        %v780 = vsel %vm679, %v635, 0
        %782 = vmatpush.bf16.msra.mxu0 0
        %783 = vmatpush.bf16.msra.mxu0 0
        %784 = vmatpush.bf16.msra.mxu0 0
        %785 = vmatpush.bf16.msra.mxu0 0
        %786 = vmatpush.bf16.msra.mxu0 0
        %787 = vmatpush.bf16.msra.mxu0 0
        %788 = vmatpush.bf16.msra.mxu0 0
        %789 = vmatpush.bf16.msra.mxu0 %v780
        %790 = vmatmul.bf16.gmra.mxu0 %v777
        %v791 = vpop.f32.mrf.mxu0
        %v792 = vadd.f32 %v773, %v791
        %v793 = vpop.f32.mrf.mxu0
        %794 = vdwg.mxu0
        %795 = vrot.lane.b32.xlu0 %v699, 112
        %v796 = vpop.permute.xlu0 %795
        %797 = vrot.lane.b32.xlu0 %v673, 112
        %v798 = vpop.permute.xlu0 %797
        %v800 = vsel %vm639, %v796, 0
        %v803 = vsel %vm639, %v798, 0
        %805 = vmatpush.bf16.xpose.msra.mxu0 0
        %806 = vmatpush.bf16.xpose.msra.mxu0 0
        %807 = vmatpush.bf16.xpose.msra.mxu0 0
        %808 = vmatpush.bf16.xpose.msra.mxu0 0
        %809 = vmatpush.bf16.xpose.msra.mxu0 0
        %810 = vmatpush.bf16.xpose.msra.mxu0 0
        %811 = vmatpush.bf16.xpose.msra.mxu0 0
        %812 = vmatpush.bf16.xpose.msra.mxu0 %v803
        %813 = vmatmul.bf16.gmra.mxu0 %v800
        %v814 = vpop.f32.mrf.mxu0
        %v815 = vadd.f32 %v634, %v814
        %v816 = vpop.f32.mrf.mxu0
        %817 = vdwg.mxu0
        %v818 = vsel %vm639, %v815, -inf
        %819 = vmax.xlane.f32.xlu0 %v818
        %v820 = vpop.xlane.xlu0 %819
        %v821 = vsub.f32 %v815, %v820
        %v822 = vmul.f32 %v821, 1.442695
        %v823 = vpow.pop %v822
        %v824 = vsel %vm639, %v823, 0.0
        %825 = vadd.xlane.f32.xlu0 %v824
        %v826 = vpop.xlane.xlu0 %825
        %v827 = vrcp.pop %v826
        %v828 = vmul.f32 %v823, %v827
        %v829 = vpack.c.bf16 %v828, %v828
        %830 = vrot.lane.b32.xlu0 %v673, 80
        %v831 = vpop.permute.xlu0 %830
        %v833 = vsel %vm639, %v829, 0
        %v836 = vsel %vm679, %v831, 0
        %838 = vmatpush.bf16.msra.mxu0 0
        %839 = vmatpush.bf16.msra.mxu0 0
        %840 = vmatpush.bf16.msra.mxu0 0
        %841 = vmatpush.bf16.msra.mxu0 0
        %842 = vmatpush.bf16.msra.mxu0 0
        %843 = vmatpush.bf16.msra.mxu0 0
        %844 = vmatpush.bf16.msra.mxu0 0
        %845 = vmatpush.bf16.msra.mxu0 %v836
        %846 = vmatmul.bf16.gmra.mxu0 %v833
        %v847 = vpop.f32.mrf.mxu0
        %v848 = vadd.f32 0.0, %v847
        %v849 = vpop.f32.mrf.mxu0
        %850 = vdwg.mxu0
        %v851 = vpack.c.bf16 %v848, %v848
        %v853 = vsel %vm639, %v851, 0
        %v856 = vsel %vm679, %v637, 0
        %858 = vmatpush.bf16.msra.mxu0 0
        %859 = vmatpush.bf16.msra.mxu0 0
        %860 = vmatpush.bf16.msra.mxu0 0
        %861 = vmatpush.bf16.msra.mxu0 0
        %862 = vmatpush.bf16.msra.mxu0 0
        %863 = vmatpush.bf16.msra.mxu0 0
        %864 = vmatpush.bf16.msra.mxu0 0
        %865 = vmatpush.bf16.msra.mxu0 %v856
        %866 = vmatmul.bf16.gmra.mxu0 %v853
        %v867 = vpop.f32.mrf.mxu0
        %v868 = vadd.f32 0.0, %v867
        %v869 = vpop.f32.mrf.mxu0
        %870 = vdwg.mxu0
        %v871 = vadd.f32 %v792, %v868
        %872 = vrot.lane.b32.xlu0 %v699, 104
        %v873 = vpop.permute.xlu0 %872
        %874 = vrot.lane.b32.xlu0 %v673, 104
        %v875 = vpop.permute.xlu0 %874
        %v877 = vsel %vm639, %v873, 0
        %v880 = vsel %vm639, %v875, 0
        %882 = vmatpush.bf16.xpose.msra.mxu0 0
        %883 = vmatpush.bf16.xpose.msra.mxu0 0
        %884 = vmatpush.bf16.xpose.msra.mxu0 0
        %885 = vmatpush.bf16.xpose.msra.mxu0 0
        %886 = vmatpush.bf16.xpose.msra.mxu0 0
        %887 = vmatpush.bf16.xpose.msra.mxu0 0
        %888 = vmatpush.bf16.xpose.msra.mxu0 0
        %889 = vmatpush.bf16.xpose.msra.mxu0 %v880
        %890 = vmatmul.bf16.gmra.mxu0 %v877
        %v891 = vpop.f32.mrf.mxu0
        %v892 = vadd.f32 %v634, %v891
        %v893 = vpop.f32.mrf.mxu0
        %894 = vdwg.mxu0
        %v895 = vsel %vm639, %v892, -inf
        %896 = vmax.xlane.f32.xlu0 %v895
        %v897 = vpop.xlane.xlu0 %896
        %v898 = vsub.f32 %v892, %v897
        %v899 = vmul.f32 %v898, 1.442695
        %v900 = vpow.pop %v899
        %v901 = vsel %vm639, %v900, 0.0
        %902 = vadd.xlane.f32.xlu0 %v901
        %v903 = vpop.xlane.xlu0 %902
        %v904 = vrcp.pop %v903
        %v905 = vmul.f32 %v900, %v904
        %v906 = vpack.c.bf16 %v905, %v905
        %907 = vrot.lane.b32.xlu0 %v673, 72
        %v908 = vpop.permute.xlu0 %907
        %v910 = vsel %vm639, %v906, 0
        %v913 = vsel %vm679, %v908, 0
        %915 = vmatpush.bf16.msra.mxu0 0
        %916 = vmatpush.bf16.msra.mxu0 0
        %917 = vmatpush.bf16.msra.mxu0 0
        %918 = vmatpush.bf16.msra.mxu0 0
        %919 = vmatpush.bf16.msra.mxu0 0
        %920 = vmatpush.bf16.msra.mxu0 0
        %921 = vmatpush.bf16.msra.mxu0 0
        %922 = vmatpush.bf16.msra.mxu0 %v913
        %923 = vmatmul.bf16.gmra.mxu0 %v910
        %v924 = vpop.f32.mrf.mxu0
        %v925 = vadd.f32 0.0, %v924
        %v926 = vpop.f32.mrf.mxu0
        %927 = vdwg.mxu0
        %v928 = vpack.c.bf16 %v925, %v925
        %v930 = vsel %vm639, %v928, 0
        %v933 = vsel %vm679, %v638, 0
        %935 = vmatpush.bf16.msra.mxu0 0
        %936 = vmatpush.bf16.msra.mxu0 0
        %937 = vmatpush.bf16.msra.mxu0 0
        %938 = vmatpush.bf16.msra.mxu0 0
        %939 = vmatpush.bf16.msra.mxu0 0
        %940 = vmatpush.bf16.msra.mxu0 0
        %941 = vmatpush.bf16.msra.mxu0 0
        %942 = vmatpush.bf16.msra.mxu0 %v933
        %943 = vmatmul.bf16.gmra.mxu0 %v930
        %v944 = vpop.f32.mrf.mxu0
        %v945 = vadd.f32 0.0, %v944
        %v946 = vpop.f32.mrf.mxu0
        %947 = vdwg.mxu0
        %v948 = vadd.f32 %v871, %v945
        %v949 = vld [vmem:[%s9] sm:$0x1]
        %v951 = vperm.slane %v949, 0
        %v953 = vadd.f32 %v948, %v951
        %v954 = vadd.f32 %v485, %v953
        %955 = vst.msk [vmem:[%s481] sm:$0xff] %vm486, %v954
        %s956 = sand.u32 %s275, 1
        %s957 = scalar_lea.sflag [#allocation4], %s956
        %s958 = sand.u32 %s275, 1
        %s959 = smul.addr %s958, 8
        %s960 = scalar_lea.vmem [#allocation11], %s959
        // Predicated region
        $region81: #{tpu_custom_call.1} parent=59 // pred_check
          %p961 = pneg %p285
        $region82: #{tpu_custom_call.1} parent=59 // pred_check_branch
          %963 = sbr.rel (%p961) target = $region84
        $region83: #{tpu_custom_call.1} parent=59 // pred_region
          %965 = vsyncadd %s957, 0
          %s966 = sadd.s32 %s36, %s35
          %s967 = smul.addr %s966, 8
          %s968 = scalar_lea.hbm %s10, %s967
          %s970 = sshll.u32 %s960, 4
          %s971 = int_to_ptr.vmem [resolvable:$true] %s970
          %s972 = sshll.u32 %s968, 4
          %s973 = int_to_ptr.hbm [resolvable:$true] %s972
          %975 = dma.vmem_to_hbm [thread:$0]  %s971, 128, %s973, %s957
        $region84: #{tpu_custom_call.1} parent=59 // pred_fallthru
          _
      $region60: #{tpu_custom_call.1} parent=5 // pred_fallthru
        _
      %p976 = scmp.le.s32.totalorder 2, %s26
      // Predicated region
      $region85: #{tpu_custom_call.1} parent=5 // pred_check
        %p977 = pneg %p976
      $region86: #{tpu_custom_call.1} parent=5 // pred_check_branch
        %979 = sbr.rel (%p977) target = $region88
      $region87: #{tpu_custom_call.1} parent=5 // pred_region
        %s980 = ssub.s32 %s26, 2
        // Predicated region
        $region89: #{tpu_custom_call.1} parent=87 // pred_check
          %p981 = pneg %p291
        $region90: #{tpu_custom_call.1} parent=87 // pred_check_branch
          %983 = sbr.rel (%p981) target = $region92
        $region91: #{tpu_custom_call.1} parent=87 // pred_region
          %s984 = sand.u32 %s276, 1
          %s985 = scalar_lea.sflag [#allocation4], %s984
          %s986 = sand.u32 %s276, 1
          %s987 = smul.addr %s986, 8
          %s988 = scalar_lea.vmem [#allocation11], %s987
          %990 = dma.done %s985, 128
        $region92: #{tpu_custom_call.1} parent=87 // pred_fallthru
          _
      $region88: #{tpu_custom_call.1} parent=5 // pred_fallthru
        _
    $region6: #{tpu_custom_call.1} parent=1 // loop_footer
      %s30 = sadd.s32 1, %s26
    $region7: #{tpu_custom_call.1} parent=1 // loop_footer_branch
      %25 = sbr.rel target = $region3
    $region8: #{tpu_custom_call.1} parent=1 // loop_exit
      _
    %991 = vsyncpa [#allocation3], 1
    %s992 = scalar_lea.sflag [#allocation3], 1
    %993 = vsyncpa %s992, 1
    %994 = vsyncpa [#allocation6], 1
    %s995 = scalar_lea.sflag [#allocation6], 1
    %996 = vsyncpa %s995, 1
    %997 = vsyncpa [#allocation9], 1
    %998 = vsyncpa [#allocation4], 1
    %s999 = scalar_lea.sflag [#allocation4], 1
    %1000 = vsyncpa %s999, 1

</llo_original>
